<compile_context>
chip_gen: v6e
topology: v6e:2x2x1
jax: 0.10.0
libtpu: 0.0.40
codegen_flags: <defaults>
</compile_context>

<pallas_src>
import jax
import jax.numpy as jnp
from jax.experimental import pallas as pl
from jax.experimental.pallas import tpu as pltpu


# ---------------------------------------------------------------------------
# Pass 1: per-tile input statistics (sum + Gram) for the two conv branches.
# ---------------------------------------------------------------------------
def _stats_kernel(g_ref, x_ref, gram_g_ref, sum_g_ref, gram_x_ref, sum_x_ref):
    g = g_ref[...]                            # (F_g, T)
    x = x_ref[...]                            # (F_l, T)
    dn = (((1,), (1,)), ((), ()))             # contract the lane (spatial) axis
    gram_g_ref[...] = jax.lax.dot_general(g, g, dn,
                                          preferred_element_type=jnp.float32)
    gram_x_ref[...] = jax.lax.dot_general(x, x, dn,
                                          preferred_element_type=jnp.float32)
    sum_g_ref[...] = jnp.sum(g, axis=-1, keepdims=True)
    sum_x_ref[...] = jnp.sum(x, axis=-1, keepdims=True)


# ---------------------------------------------------------------------------
# Pass 2: BN-folded conv + ReLU + psi projection; stash pre-BN psi row + stats.
# ---------------------------------------------------------------------------
def _hpsi_kernel(g_ref, x_ref, wg_ref, wx_ref, b_ref, wp_ref,
                 p_ref, psum_ref, psq_ref):
    # BN_g / BN_x are folded into wg_ref / wx_ref / b_ref, so the ReLU input is
    # a plain affine of the two tiles (zero per-element BN work).
    # TODO(synk): fuse into a single MXU push by stacking [g; x] on sublanes if
    # a channel-stacked producer layout becomes available (unaligned 4-row
    # sublane concat inside the kernel is avoided for lowering robustness).
    r = jnp.dot(wg_ref[...], g_ref[...], preferred_element_type=jnp.float32)
    r = r + jnp.dot(wx_ref[...], x_ref[...], preferred_element_type=jnp.float32)
    h = jnp.maximum(r + b_ref[...], 0.0)                   # (F_int, T)
    # psi projection (Cout == 1): sublane broadcast-mul + sublane reduce.
    p = jnp.sum(wp_ref[...] * h, axis=0, keepdims=True)    # (1, T)
    p_ref[...] = p
    psum_ref[...] = jnp.sum(p, axis=-1, keepdims=True)
    psq_ref[...] = jnp.sum(p * p, axis=-1, keepdims=True)


# ---------------------------------------------------------------------------
# Pass 3: psi BN (folded scalar affine) + sigmoid + gate.
# ---------------------------------------------------------------------------
def _gate_kernel(x_ref, p_ref, sp_ref, bp_ref, o_ref):
    t = p_ref[...] * sp_ref[...] + bp_ref[...]             # (1, T)
    # Exact sigmoid: the divide touches only a (1, T) row; pl.reciprocal(
    # approx=True) would shift it to the EUP but loosens the 1e-4 check.
    psi = 1.0 / (1.0 + jnp.exp(-t))
    o_ref[...] = x_ref[...] * psi                          # sublane-broadcast gate


def _pick_tile(hw):
    for t in (2048, 1024, 512, 256, 128):
        if hw % t == 0:
            return t
    return hw   # odd spatial sizes: one full-row (masked-store) tile


def attention_block(g_nchw, x_nchw,
                    wg, bg_conv, wx, bx_conv, wpsi, bpsi_conv,
                    gamma_g, beta_g, gamma_x, beta_x, gamma_p, beta_p,
                    *, eps=1e-5):
    """g: (N,F_g,H,W); x: (N,F_l,H,W); conv weights OIHW (1x1). Out: (N,F_l,H,W)."""
    N, F_g, H, W = g_nchw.shape
    _, F_l, _, _ = x_nchw.shape
    F_int = wg.shape[0]
    HW = H * W
    M = N * HW

    # Training-mode BN subtracts the batch mean of the conv output, which
    # cancels the conv bias exactly -> biases intentionally unused (exact).
    del bg_conv, bx_conv, bpsi_conv
    # TODO(synk): BatchNorm running_mean/running_var buffer updates (training
    # side effect) are not materialized; forward values are unaffected.

    f32 = jnp.float32
    g_r = g_nchw.reshape(N, F_g, HW).astype(f32)   # free reshape, no transpose
    x_r = x_nchw.reshape(N, F_l, HW).astype(f32)
    wg2 = wg.reshape(F_int, F_g).astype(f32)
    wx2 = wx.reshape(F_int, F_l).astype(f32)
    wp_col = wpsi.reshape(F_int, 1).astype(f32)

    TILE = _pick_tile(HW)
    Mt = HW // TILE
    grid = (N, Mt)
    cparams = pltpu.CompilerParams(
        dimension_semantics=("parallel", "parallel"),
        vmem_limit_bytes=32 * 1024 * 1024)

    def act_spec(c):     # activation tile: (batch-squeezed, channels, lanes)
        return pl.BlockSpec((None, c, TILE), lambda n, m: (n, 0, m))

    def part_spec(r, c):  # per-(n, m) partial-statistics block
        return pl.BlockSpec((None, None, r, c), lambda n, m: (n, m, 0, 0))

    def full_spec(shape):  # small parameter, same block every grid step
        return pl.BlockSpec(shape, lambda n, m: (0,) * len(shape))

    # ---- pass 1: input sums + Gram matrices --------------------------------
    gram_g_p, sum_g_p, gram_x_p, sum_x_p = pl.pallas_call(
        _stats_kernel,
        out_shape=(jax.ShapeDtypeStruct((N, Mt, F_g, F_g), f32),
                   jax.ShapeDtypeStruct((N, Mt, F_g, 1), f32),
                   jax.ShapeDtypeStruct((N, Mt, F_l, F_l), f32),
                   jax.ShapeDtypeStruct((N, Mt, F_l, 1), f32)),
        grid=grid,
        in_specs=[act_spec(F_g), act_spec(F_l)],
        out_specs=(part_spec(F_g, F_g), part_spec(F_g, 1),
                   part_spec(F_l, F_l), part_spec(F_l, 1)),
        compiler_params=cparams,
    )(g_r, x_r)

    # Fold training-mode BN into effective conv weights / bias (tiny jnp math).
    def branch_affine(w, gamma, beta, gram_parts, sum_parts):
        s = jnp.sum(sum_parts, axis=(0, 1))              # (Cin, 1)
        gm = jnp.sum(gram_parts, axis=(0, 1))            # (Cin, Cin)
        mean_in = s / M
        cov_in = gm / M - mean_in * mean_in.T            # E[zz^T] - m m^T
        mean_c = w @ mean_in                             # conv-output mean
        var_c = jnp.sum((w @ cov_in) * w, axis=1, keepdims=True)
        scale = gamma.reshape(-1, 1) * jax.lax.rsqrt(var_c + eps)
        bias = beta.reshape(-1, 1) - mean_c * scale
        return w * scale, bias

    wg_eff, bg_eff = branch_affine(wg2, gamma_g, beta_g, gram_g_p, sum_g_p)
    wx_eff, bx_eff = branch_affine(wx2, gamma_x, beta_x, gram_x_p, sum_x_p)
    b_eff = bg_eff + bx_eff

    # ---- pass 2: folded conv + ReLU + psi projection ------------------------
    p_rows, psum_p, psq_p = pl.pallas_call(
        _hpsi_kernel,
        out_shape=(jax.ShapeDtypeStruct((N, 1, HW), f32),
                   jax.ShapeDtypeStruct((N, Mt, 1, 1), f32),
                   jax.ShapeDtypeStruct((N, Mt, 1, 1), f32)),
        grid=grid,
        in_specs=[act_spec(F_g), act_spec(F_l),
                  full_spec((F_int, F_g)), full_spec((F_int, F_l)),
                  full_spec((F_int, 1)), full_spec((F_int, 1))],
        out_specs=(act_spec(1), part_spec(1, 1), part_spec(1, 1)),
        compiler_params=cparams,
    )(g_r, x_r, wg_eff, wx_eff, b_eff, wp_col)

    # psi BatchNorm (single channel) folded to a scalar affine.
    mean_p = jnp.sum(psum_p) / M
    var_p = jnp.sum(psq_p) / M - mean_p * mean_p
    scale_p = (gamma_p.reshape(1, 1) * jax.lax.rsqrt(var_p + eps)).astype(f32)
    bias_p = (beta_p.reshape(1, 1) - mean_p * scale_p).astype(f32)

    # ---- pass 3: sigmoid gate ------------------------------------------------
    # input_output_aliases={0: 0} (x -> out) is intentionally NOT used: with the
    # NCHW contract x is a non-donated caller buffer, so XLA would insert a
    # defensive copy and make it slower, not faster.
    out_r = pl.pallas_call(
        _gate_kernel,
        out_shape=jax.ShapeDtypeStruct((N, F_l, HW), f32),
        grid=grid,
        in_specs=[act_spec(F_l), act_spec(1),
                  full_spec((1, 1)), full_spec((1, 1))],
        out_specs=act_spec(F_l),
        compiler_params=cparams,
    )(x_r, p_rows, scale_p, bias_p)

    return out_r.reshape(N, F_l, H, W)


def _reference(g, x, wg, bg, wx, bx, wp, bp,
               gamma_g, beta_g, gamma_x, beta_x, gamma_p, beta_p, *, eps=1e-5):
    """Pure-JAX/XLA reference of the PyTorch forward (training-mode BN), NCHW."""
    def conv1x1(z, w, b):
        return jnp.einsum("nchw,oc->nohw", z, w[:, :, 0, 0]) + b.reshape(1, -1, 1, 1)

    def bn(z, gamma, beta):
        m = jnp.mean(z, axis=(0, 2, 3), keepdims=True)
        v = jnp.mean((z - m) ** 2, axis=(0, 2, 3), keepdims=True)
        return ((z - m) * jax.lax.rsqrt(v + eps) * gamma.reshape(1, -1, 1, 1)
                + beta.reshape(1, -1, 1, 1))

    g1 = bn(conv1x1(g, wg, bg), gamma_g, beta_g)
    x1 = bn(conv1x1(x, wx, bx), gamma_x, beta_x)
    h = jnp.maximum(g1 + x1, 0.0)
    psi = jax.nn.sigmoid(bn(conv1x1(h, wp, bp), gamma_p, beta_p))
    return x * psi


if __name__ == "__main__":
    key = jax.random.PRNGKey(0)
    keys = jax.random.split(key, 14)

    N, F_g, F_l, F_int, H, W = 2, 4, 4, 8, 16, 16

    g = jax.random.normal(keys[0], (N, F_g, H, W), dtype=jnp.float32)
    x = jax.random.normal(keys[1], (N, F_l, H, W), dtype=jnp.float32)

    def uinit(k, shape, fan_in):
        bound = 1.0 / (fan_in ** 0.5)
        return jax.random.uniform(k, shape, jnp.float32, -bound, bound)

    # Parameter shapes from AttentionBlock.__init__ (1x1 convs, OIHW).
    wg = uinit(keys[2], (F_int, F_g, 1, 1), F_g)
    bg = uinit(keys[3], (F_int,), F_g)
    wx = uinit(keys[4], (F_int, F_l, 1, 1), F_l)
    bx = uinit(keys[5], (F_int,), F_l)
    wp = uinit(keys[6], (1, F_int, 1, 1), F_int)
    bp = uinit(keys[7], (1,), F_int)
    gamma_g = 1.0 + 0.1 * jax.random.normal(keys[8], (F_int,), dtype=jnp.float32)
    beta_g = 0.1 * jax.random.normal(keys[9], (F_int,), dtype=jnp.float32)
    gamma_x = 1.0 + 0.1 * jax.random.normal(keys[10], (F_int,), dtype=jnp.float32)
    beta_x = 0.1 * jax.random.normal(keys[11], (F_int,), dtype=jnp.float32)
    gamma_p = 1.0 + 0.1 * jax.random.normal(keys[12], (1,), dtype=jnp.float32)
    beta_p = 0.1 * jax.random.normal(keys[13], (1,), dtype=jnp.float32)

    attention_fn = jax.jit(attention_block)
    out = jax.block_until_ready(
        attention_fn(g, x, wg, bg, wx, bx, wp, bp,
                     gamma_g, beta_g, gamma_x, beta_x, gamma_p, beta_p))

    ref = jax.block_until_ready(
        _reference(g, x, wg, bg, wx, bx, wp, bp,
                   gamma_g, beta_g, gamma_x, beta_x, gamma_p, beta_p))

    assert out.shape == (N, F_l, H, W)
    assert jnp.allclose(out, ref, rtol=1e-4, atol=1e-4), \
        f"max abs err {jnp.max(jnp.abs(out - ref))}"

    print("KERNEL_OK")
</pallas_src>

<mosaic_0001>
module attributes {stable_mosaic.version = 11 : i64} {
  func.func @_stats_kernel(%arg0: i32, %arg1: i32, %arg2: memref<1x4x256xf32, #tpu.memory_space<vmem>>, %arg3: memref<1x4x256xf32, #tpu.memory_space<vmem>>, %arg4: memref<1x1x4x4xf32, #tpu.memory_space<vmem>>, %arg5: memref<1x1x4x1xf32, #tpu.memory_space<vmem>>, %arg6: memref<1x1x4x4xf32, #tpu.memory_space<vmem>>, %arg7: memref<1x1x4x1xf32, #tpu.memory_space<vmem>>) attributes {dimension_semantics = [#tpu.dimension_semantics<parallel>, #tpu.dimension_semantics<parallel>], iteration_bounds = array<i64: 2, 1>, scalar_prefetch = 0 : i64, scratch_operands = 0 : i64, tpu.core_type = #tpu.core_type<tc>, window_params = [{transform_indices = @transform_0, window_bounds = array<i64: 1, 4, 256>}, {transform_indices = @transform_1, window_bounds = array<i64: 1, 4, 256>}, {transform_indices = @transform_2, window_bounds = array<i64: 1, 1, 4, 4>}, {transform_indices = @transform_3, window_bounds = array<i64: 1, 1, 4, 1>}, {transform_indices = @transform_4, window_bounds = array<i64: 1, 1, 4, 4>}, {transform_indices = @transform_5, window_bounds = array<i64: 1, 1, 4, 1>}]} {
    %c0 = arith.constant 0 : index
    %c0_0 = arith.constant 0 : index
    %c0_1 = arith.constant 0 : index
    %0 = vector.load %arg2[%c0, %c0_0, %c0_1] : memref<1x4x256xf32, #tpu.memory_space<vmem>>, vector<1x4x256xf32>
    %1 = vector.shape_cast %0 : vector<1x4x256xf32> to vector<4x256xf32>
    %c0_2 = arith.constant 0 : index
    %c0_3 = arith.constant 0 : index
    %c0_4 = arith.constant 0 : index
    %2 = vector.load %arg3[%c0_2, %c0_3, %c0_4] : memref<1x4x256xf32, #tpu.memory_space<vmem>>, vector<1x4x256xf32>
    %3 = vector.shape_cast %2 : vector<1x4x256xf32> to vector<4x256xf32>
    %cst = arith.constant dense<0.000000e+00> : vector<4x4xf32>
    %4 = tpu.matmul %1, %1, %cst {dimension_numbers = #tpu.dot_dimension_numbers<[1], [1], [0], [0], [0, 0, 1, 0], [], []>} : vector<4x256xf32>, vector<4x256xf32>, vector<4x4xf32> -> vector<4x4xf32>
    %c0_5 = arith.constant 0 : index
    %c0_6 = arith.constant 0 : index
    %c0_7 = arith.constant 0 : index
    %c0_8 = arith.constant 0 : index
    %5 = vector.load %arg4[%c0_5, %c0_6, %c0_7, %c0_8] : memref<1x1x4x4xf32, #tpu.memory_space<vmem>>, vector<1x1x4x4xf32>
    %6 = vector.shape_cast %5 : vector<1x1x4x4xf32> to vector<4x4xf32>
    %7 = vector.shape_cast %4 : vector<4x4xf32> to vector<1x1x4x4xf32>
    tpu.vector_store %arg4[%c0_5, %c0_6, %c0_7, %c0_8], %7 {strides = array<i32>} : memref<1x1x4x4xf32, #tpu.memory_space<vmem>>, vector<1x1x4x4xf32>,
    %cst_9 = arith.constant dense<0.000000e+00> : vector<4x4xf32>
    %8 = tpu.matmul %3, %3, %cst_9 {dimension_numbers = #tpu.dot_dimension_numbers<[1], [1], [0], [0], [0, 0, 1, 0], [], []>} : vector<4x256xf32>, vector<4x256xf32>, vector<4x4xf32> -> vector<4x4xf32>
    %c0_10 = arith.constant 0 : index
    %c0_11 = arith.constant 0 : index
    %c0_12 = arith.constant 0 : index
    %c0_13 = arith.constant 0 : index
    %9 = vector.load %arg6[%c0_10, %c0_11, %c0_12, %c0_13] : memref<1x1x4x4xf32, #tpu.memory_space<vmem>>, vector<1x1x4x4xf32>
    %10 = vector.shape_cast %9 : vector<1x1x4x4xf32> to vector<4x4xf32>
    %11 = vector.shape_cast %8 : vector<4x4xf32> to vector<1x1x4x4xf32>
    tpu.vector_store %arg6[%c0_10, %c0_11, %c0_12, %c0_13], %11 {strides = array<i32>} : memref<1x1x4x4xf32, #tpu.memory_space<vmem>>, vector<1x1x4x4xf32>,
    %cst_14 = arith.constant dense<0.000000e+00> : vector<4xf32>
    %12 = vector.multi_reduction <add>, %1, %cst_14 [1] : vector<4x256xf32> to vector<4xf32>
    %13 = vector.shape_cast %12 : vector<4xf32> to vector<4x1xf32>
    %c0_15 = arith.constant 0 : index
    %c0_16 = arith.constant 0 : index
    %c0_17 = arith.constant 0 : index
    %c0_18 = arith.constant 0 : index
    %14 = vector.load %arg5[%c0_15, %c0_16, %c0_17, %c0_18] : memref<1x1x4x1xf32, #tpu.memory_space<vmem>>, vector<1x1x4x1xf32>
    %15 = vector.shape_cast %14 : vector<1x1x4x1xf32> to vector<4x1xf32>
    %16 = vector.shape_cast %13 : vector<4x1xf32> to vector<1x1x4x1xf32>
    tpu.vector_store %arg5[%c0_15, %c0_16, %c0_17, %c0_18], %16 {strides = array<i32>} : memref<1x1x4x1xf32, #tpu.memory_space<vmem>>, vector<1x1x4x1xf32>,
    %cst_19 = arith.constant dense<0.000000e+00> : vector<4xf32>
    %17 = vector.multi_reduction <add>, %3, %cst_19 [1] : vector<4x256xf32> to vector<4xf32>
    %18 = vector.shape_cast %17 : vector<4xf32> to vector<4x1xf32>
    %c0_20 = arith.constant 0 : index
    %c0_21 = arith.constant 0 : index
    %c0_22 = arith.constant 0 : index
    %c0_23 = arith.constant 0 : index
    %19 = vector.load %arg7[%c0_20, %c0_21, %c0_22, %c0_23] : memref<1x1x4x1xf32, #tpu.memory_space<vmem>>, vector<1x1x4x1xf32>
    %20 = vector.shape_cast %19 : vector<1x1x4x1xf32> to vector<4x1xf32>
    %21 = vector.shape_cast %18 : vector<4x1xf32> to vector<1x1x4x1xf32>
    tpu.vector_store %arg7[%c0_20, %c0_21, %c0_22, %c0_23], %21 {strides = array<i32>} : memref<1x1x4x1xf32, #tpu.memory_space<vmem>>, vector<1x1x4x1xf32>,
    return
  }
  func.func @transform_0(%arg0: i32, %arg1: i32) -> (i32, i32, i32) {
    %c0_i32 = arith.constant 0 : i32
    %c0_i32_0 = arith.constant 0 : i32
    return %arg0, %c0_i32, %arg1 : i32, i32, i32
  }
  func.func @transform_1(%arg0: i32, %arg1: i32) -> (i32, i32, i32) {
    %c0_i32 = arith.constant 0 : i32
    %c0_i32_0 = arith.constant 0 : i32
    return %arg0, %c0_i32, %arg1 : i32, i32, i32
  }
  func.func @transform_2(%arg0: i32, %arg1: i32) -> (i32, i32, i32, i32) {
    %c0_i32 = arith.constant 0 : i32
    %c0_i32_0 = arith.constant 0 : i32
    %c0_i32_1 = arith.constant 0 : i32
    return %arg0, %arg1, %c0_i32, %c0_i32_0 : i32, i32, i32, i32
  }
  func.func @transform_3(%arg0: i32, %arg1: i32) -> (i32, i32, i32, i32) {
    %c0_i32 = arith.constant 0 : i32
    %c0_i32_0 = arith.constant 0 : i32
    %c0_i32_1 = arith.constant 0 : i32
    return %arg0, %arg1, %c0_i32, %c0_i32_0 : i32, i32, i32, i32
  }
  func.func @transform_4(%arg0: i32, %arg1: i32) -> (i32, i32, i32, i32) {
    %c0_i32 = arith.constant 0 : i32
    %c0_i32_0 = arith.constant 0 : i32
    %c0_i32_1 = arith.constant 0 : i32
    return %arg0, %arg1, %c0_i32, %c0_i32_0 : i32, i32, i32, i32
  }
  func.func @transform_5(%arg0: i32, %arg1: i32) -> (i32, i32, i32, i32) {
    %c0_i32 = arith.constant 0 : i32
    %c0_i32_0 = arith.constant 0 : i32
    %c0_i32_1 = arith.constant 0 : i32
    return %arg0, %arg1, %c0_i32, %c0_i32_0 : i32, i32, i32, i32
  }
}

module attributes {stable_mosaic.version = 11 : i64} {
  func.func @_hpsi_kernel(%arg0: i32, %arg1: i32, %arg2: memref<1x4x256xf32, #tpu.memory_space<vmem>>, %arg3: memref<1x4x256xf32, #tpu.memory_space<vmem>>, %arg4: memref<8x4xf32, #tpu.memory_space<vmem>>, %arg5: memref<8x4xf32, #tpu.memory_space<vmem>>, %arg6: memref<8x1xf32, #tpu.memory_space<vmem>>, %arg7: memref<8x1xf32, #tpu.memory_space<vmem>>, %arg8: memref<1x1x256xf32, #tpu.memory_space<vmem>>, %arg9: memref<1x1x1x1xf32, #tpu.memory_space<vmem>>, %arg10: memref<1x1x1x1xf32, #tpu.memory_space<vmem>>) attributes {dimension_semantics = [#tpu.dimension_semantics<parallel>, #tpu.dimension_semantics<parallel>], iteration_bounds = array<i64: 2, 1>, scalar_prefetch = 0 : i64, scratch_operands = 0 : i64, tpu.core_type = #tpu.core_type<tc>, window_params = [{transform_indices = @transform_0, window_bounds = array<i64: 1, 4, 256>}, {transform_indices = @transform_1, window_bounds = array<i64: 1, 4, 256>}, {pipeline_mode = #tpu.pipeline_mode<synchronous>, transform_indices = @transform_2, window_bounds = array<i64: 8, 4>}, {pipeline_mode = #tpu.pipeline_mode<synchronous>, transform_indices = @transform_3, window_bounds = array<i64: 8, 4>}, {pipeline_mode = #tpu.pipeline_mode<synchronous>, transform_indices = @transform_4, window_bounds = array<i64: 8, 1>}, {pipeline_mode = #tpu.pipeline_mode<synchronous>, transform_indices = @transform_5, window_bounds = array<i64: 8, 1>}, {transform_indices = @transform_6, window_bounds = array<i64: 1, 1, 256>}, {transform_indices = @transform_7, window_bounds = array<i64: 1, 1, 1, 1>}, {transform_indices = @transform_8, window_bounds = array<i64: 1, 1, 1, 1>}]} {
    %c0 = arith.constant 0 : index
    %c0_0 = arith.constant 0 : index
    %0 = vector.load %arg4[%c0, %c0_0] : memref<8x4xf32, #tpu.memory_space<vmem>>, vector<8x4xf32>
    %c0_1 = arith.constant 0 : index
    %c0_2 = arith.constant 0 : index
    %c0_3 = arith.constant 0 : index
    %1 = vector.load %arg2[%c0_1, %c0_2, %c0_3] : memref<1x4x256xf32, #tpu.memory_space<vmem>>, vector<1x4x256xf32>
    %2 = vector.shape_cast %1 : vector<1x4x256xf32> to vector<4x256xf32>
    %cst = arith.constant dense<0.000000e+00> : vector<8x256xf32>
    %3 = tpu.matmul %0, %2, %cst {dimension_numbers = #tpu.dot_dimension_numbers<[1], [0], [0], [1], [0, 0, 1, 1], [], []>} : vector<8x4xf32>, vector<4x256xf32>, vector<8x256xf32> -> vector<8x256xf32>
    %c0_4 = arith.constant 0 : index
    %c0_5 = arith.constant 0 : index
    %4 = vector.load %arg5[%c0_4, %c0_5] : memref<8x4xf32, #tpu.memory_space<vmem>>, vector<8x4xf32>
    %c0_6 = arith.constant 0 : index
    %c0_7 = arith.constant 0 : index
    %c0_8 = arith.constant 0 : index
    %5 = vector.load %arg3[%c0_6, %c0_7, %c0_8] : memref<1x4x256xf32, #tpu.memory_space<vmem>>, vector<1x4x256xf32>
    %6 = vector.shape_cast %5 : vector<1x4x256xf32> to vector<4x256xf32>
    %cst_9 = arith.constant dense<0.000000e+00> : vector<8x256xf32>
    %7 = tpu.matmul %4, %6, %cst_9 {dimension_numbers = #tpu.dot_dimension_numbers<[1], [0], [0], [1], [0, 0, 1, 1], [], []>} : vector<8x4xf32>, vector<4x256xf32>, vector<8x256xf32> -> vector<8x256xf32>
    %8 = arith.addf %3, %7 : vector<8x256xf32>
    %c0_10 = arith.constant 0 : index
    %c0_11 = arith.constant 0 : index
    %9 = vector.load %arg6[%c0_10, %c0_11] : memref<8x1xf32, #tpu.memory_space<vmem>>, vector<8x1xf32>
    %10 = vector.broadcast %9 : vector<8x1xf32> to vector<8x256xf32>
    %11 = arith.addf %8, %10 : vector<8x256xf32>
    %cst_12 = arith.constant 0.000000e+00 : f32
    %12 = vector.broadcast %cst_12 : f32 to vector<8x256xf32>
    %13 = arith.maximumf %11, %12 : vector<8x256xf32>
    %c0_13 = arith.constant 0 : index
    %c0_14 = arith.constant 0 : index
    %14 = vector.load %arg7[%c0_13, %c0_14] : memref<8x1xf32, #tpu.memory_space<vmem>>, vector<8x1xf32>
    %15 = vector.broadcast %14 : vector<8x1xf32> to vector<8x256xf32>
    %16 = arith.mulf %15, %13 : vector<8x256xf32>
    %cst_15 = arith.constant dense<0.000000e+00> : vector<256xf32>
    %17 = vector.multi_reduction <add>, %16, %cst_15 [0] : vector<8x256xf32> to vector<256xf32>
    %18 = vector.shape_cast %17 : vector<256xf32> to vector<1x256xf32>
    %c0_16 = arith.constant 0 : index
    %c0_17 = arith.constant 0 : index
    %c0_18 = arith.constant 0 : index
    %19 = vector.load %arg8[%c0_16, %c0_17, %c0_18] : memref<1x1x256xf32, #tpu.memory_space<vmem>>, vector<1x1x256xf32>
    %20 = vector.shape_cast %19 : vector<1x1x256xf32> to vector<1x256xf32>
    %21 = vector.shape_cast %18 : vector<1x256xf32> to vector<1x1x256xf32>
    tpu.vector_store %arg8[%c0_16, %c0_17, %c0_18], %21 {strides = array<i32>} : memref<1x1x256xf32, #tpu.memory_space<vmem>>, vector<1x1x256xf32>,
    %cst_19 = arith.constant dense<0.000000e+00> : vector<1xf32>
    %22 = vector.multi_reduction <add>, %18, %cst_19 [1] : vector<1x256xf32> to vector<1xf32>
    %23 = vector.shape_cast %22 : vector<1xf32> to vector<1x1xf32>
    %c0_20 = arith.constant 0 : index
    %c0_21 = arith.constant 0 : index
    %c0_22 = arith.constant 0 : index
    %c0_23 = arith.constant 0 : index
    %24 = vector.load %arg9[%c0_20, %c0_21, %c0_22, %c0_23] : memref<1x1x1x1xf32, #tpu.memory_space<vmem>>, vector<1x1x1x1xf32>
    %25 = vector.shape_cast %24 : vector<1x1x1x1xf32> to vector<1x1xf32>
    %26 = vector.shape_cast %23 : vector<1x1xf32> to vector<1x1x1x1xf32>
    tpu.vector_store %arg9[%c0_20, %c0_21, %c0_22, %c0_23], %26 {strides = array<i32>} : memref<1x1x1x1xf32, #tpu.memory_space<vmem>>, vector<1x1x1x1xf32>,
    %27 = arith.mulf %18, %18 : vector<1x256xf32>
    %cst_24 = arith.constant dense<0.000000e+00> : vector<1xf32>
    %28 = vector.multi_reduction <add>, %27, %cst_24 [1] : vector<1x256xf32> to vector<1xf32>
    %29 = vector.shape_cast %28 : vector<1xf32> to vector<1x1xf32>
    %c0_25 = arith.constant 0 : index
    %c0_26 = arith.constant 0 : index
    %c0_27 = arith.constant 0 : index
    %c0_28 = arith.constant 0 : index
    %30 = vector.load %arg10[%c0_25, %c0_26, %c0_27, %c0_28] : memref<1x1x1x1xf32, #tpu.memory_space<vmem>>, vector<1x1x1x1xf32>
    %31 = vector.shape_cast %30 : vector<1x1x1x1xf32> to vector<1x1xf32>
    %32 = vector.shape_cast %29 : vector<1x1xf32> to vector<1x1x1x1xf32>
    tpu.vector_store %arg10[%c0_25, %c0_26, %c0_27, %c0_28], %32 {strides = array<i32>} : memref<1x1x1x1xf32, #tpu.memory_space<vmem>>, vector<1x1x1x1xf32>,
    return
  }
  func.func @transform_0(%arg0: i32, %arg1: i32) -> (i32, i32, i32) {
    %c0_i32 = arith.constant 0 : i32
    %c0_i32_0 = arith.constant 0 : i32
    return %arg0, %c0_i32, %arg1 : i32, i32, i32
  }
  func.func @transform_1(%arg0: i32, %arg1: i32) -> (i32, i32, i32) {
    %c0_i32 = arith.constant 0 : i32
    %c0_i32_0 = arith.constant 0 : i32
    return %arg0, %c0_i32, %arg1 : i32, i32, i32
  }
  func.func @transform_2(%arg0: i32, %arg1: i32) -> (i32, i32) {
    %c0_i32 = arith.constant 0 : i32
    %c0_i32_0 = arith.constant 0 : i32
    %c0_i32_1 = arith.constant 0 : i32
    return %c0_i32, %c0_i32_0 : i32, i32
  }
  func.func @transform_3(%arg0: i32, %arg1: i32) -> (i32, i32) {
    %c0_i32 = arith.constant 0 : i32
    %c0_i32_0 = arith.constant 0 : i32
    %c0_i32_1 = arith.constant 0 : i32
    return %c0_i32, %c0_i32_0 : i32, i32
  }
  func.func @transform_4(%arg0: i32, %arg1: i32) -> (i32, i32) {
    %c0_i32 = arith.constant 0 : i32
    %c0_i32_0 = arith.constant 0 : i32
    %c0_i32_1 = arith.constant 0 : i32
    return %c0_i32, %c0_i32_0 : i32, i32
  }
  func.func @transform_5(%arg0: i32, %arg1: i32) -> (i32, i32) {
    %c0_i32 = arith.constant 0 : i32
    %c0_i32_0 = arith.constant 0 : i32
    %c0_i32_1 = arith.constant 0 : i32
    return %c0_i32, %c0_i32_0 : i32, i32
  }
  func.func @transform_6(%arg0: i32, %arg1: i32) -> (i32, i32, i32) {
    %c0_i32 = arith.constant 0 : i32
    %c0_i32_0 = arith.constant 0 : i32
    return %arg0, %c0_i32, %arg1 : i32, i32, i32
  }
  func.func @transform_7(%arg0: i32, %arg1: i32) -> (i32, i32, i32, i32) {
    %c0_i32 = arith.constant 0 : i32
    %c0_i32_0 = arith.constant 0 : i32
    %c0_i32_1 = arith.constant 0 : i32
    return %arg0, %arg1, %c0_i32, %c0_i32_0 : i32, i32, i32, i32
  }
  func.func @transform_8(%arg0: i32, %arg1: i32) -> (i32, i32, i32, i32) {
    %c0_i32 = arith.constant 0 : i32
    %c0_i32_0 = arith.constant 0 : i32
    %c0_i32_1 = arith.constant 0 : i32
    return %arg0, %arg1, %c0_i32, %c0_i32_0 : i32, i32, i32, i32
  }
}

module attributes {stable_mosaic.version = 11 : i64} {
  func.func @_gate_kernel(%arg0: i32, %arg1: i32, %arg2: memref<1x4x256xf32, #tpu.memory_space<vmem>>, %arg3: memref<1x1x256xf32, #tpu.memory_space<vmem>>, %arg4: memref<1x1xf32, #tpu.memory_space<vmem>>, %arg5: memref<1x1xf32, #tpu.memory_space<vmem>>, %arg6: memref<1x4x256xf32, #tpu.memory_space<vmem>>) attributes {dimension_semantics = [#tpu.dimension_semantics<parallel>, #tpu.dimension_semantics<parallel>], iteration_bounds = array<i64: 2, 1>, scalar_prefetch = 0 : i64, scratch_operands = 0 : i64, tpu.core_type = #tpu.core_type<tc>, window_params = [{transform_indices = @transform_0, window_bounds = array<i64: 1, 4, 256>}, {transform_indices = @transform_1, window_bounds = array<i64: 1, 1, 256>}, {pipeline_mode = #tpu.pipeline_mode<synchronous>, transform_indices = @transform_2, window_bounds = array<i64: 1, 1>}, {pipeline_mode = #tpu.pipeline_mode<synchronous>, transform_indices = @transform_3, window_bounds = array<i64: 1, 1>}, {transform_indices = @transform_4, window_bounds = array<i64: 1, 4, 256>}]} {
    %c0 = arith.constant 0 : index
    %c0_0 = arith.constant 0 : index
    %c0_1 = arith.constant 0 : index
    %0 = vector.load %arg3[%c0, %c0_0, %c0_1] : memref<1x1x256xf32, #tpu.memory_space<vmem>>, vector<1x1x256xf32>
    %1 = vector.shape_cast %0 : vector<1x1x256xf32> to vector<1x256xf32>
    %c0_2 = arith.constant 0 : index
    %c0_3 = arith.constant 0 : index
    %2 = vector.load %arg4[%c0_2, %c0_3] : memref<1x1xf32, #tpu.memory_space<vmem>>, vector<1x1xf32>
    %3 = vector.broadcast %2 : vector<1x1xf32> to vector<1x256xf32>
    %4 = arith.mulf %1, %3 : vector<1x256xf32>
    %c0_4 = arith.constant 0 : index
    %c0_5 = arith.constant 0 : index
    %5 = vector.load %arg5[%c0_4, %c0_5] : memref<1x1xf32, #tpu.memory_space<vmem>>, vector<1x1xf32>
    %6 = vector.broadcast %5 : vector<1x1xf32> to vector<1x256xf32>
    %7 = arith.addf %4, %6 : vector<1x256xf32>
    %cst = arith.constant 0.000000e+00 : f32
    %8 = vector.broadcast %cst : f32 to vector<1x256xf32>
    %9 = arith.subf %8, %7 : vector<1x256xf32>
    %10 = math.exp %9 : vector<1x256xf32>
    %cst_6 = arith.constant 1.000000e+00 : f32
    %11 = vector.broadcast %cst_6 : f32 to vector<1x256xf32>
    %12 = arith.addf %11, %10 : vector<1x256xf32>
    %cst_7 = arith.constant 1.000000e+00 : f32
    %13 = vector.broadcast %cst_7 : f32 to vector<1x256xf32>
    %14 = arith.divf %13, %12 : vector<1x256xf32>
    %c0_8 = arith.constant 0 : index
    %c0_9 = arith.constant 0 : index
    %c0_10 = arith.constant 0 : index
    %15 = vector.load %arg2[%c0_8, %c0_9, %c0_10] : memref<1x4x256xf32, #tpu.memory_space<vmem>>, vector<1x4x256xf32>
    %16 = vector.shape_cast %15 : vector<1x4x256xf32> to vector<4x256xf32>
    %17 = vector.broadcast %14 : vector<1x256xf32> to vector<4x256xf32>
    %18 = arith.mulf %16, %17 : vector<4x256xf32>
    %c0_11 = arith.constant 0 : index
    %c0_12 = arith.constant 0 : index
    %c0_13 = arith.constant 0 : index
    %19 = vector.load %arg6[%c0_11, %c0_12, %c0_13] : memref<1x4x256xf32, #tpu.memory_space<vmem>>, vector<1x4x256xf32>
    %20 = vector.shape_cast %19 : vector<1x4x256xf32> to vector<4x256xf32>
    %21 = vector.shape_cast %18 : vector<4x256xf32> to vector<1x4x256xf32>
    tpu.vector_store %arg6[%c0_11, %c0_12, %c0_13], %21 {strides = array<i32>} : memref<1x4x256xf32, #tpu.memory_space<vmem>>, vector<1x4x256xf32>,
    return
  }
  func.func @transform_0(%arg0: i32, %arg1: i32) -> (i32, i32, i32) {
    %c0_i32 = arith.constant 0 : i32
    %c0_i32_0 = arith.constant 0 : i32
    return %arg0, %c0_i32, %arg1 : i32, i32, i32
  }
  func.func @transform_1(%arg0: i32, %arg1: i32) -> (i32, i32, i32) {
    %c0_i32 = arith.constant 0 : i32
    %c0_i32_0 = arith.constant 0 : i32
    return %arg0, %c0_i32, %arg1 : i32, i32, i32
  }
  func.func @transform_2(%arg0: i32, %arg1: i32) -> (i32, i32) {
    %c0_i32 = arith.constant 0 : i32
    %c0_i32_0 = arith.constant 0 : i32
    %c0_i32_1 = arith.constant 0 : i32
    return %c0_i32, %c0_i32_0 : i32, i32
  }
  func.func @transform_3(%arg0: i32, %arg1: i32) -> (i32, i32) {
    %c0_i32 = arith.constant 0 : i32
    %c0_i32_0 = arith.constant 0 : i32
    %c0_i32_1 = arith.constant 0 : i32
    return %c0_i32, %c0_i32_0 : i32, i32
  }
  func.func @transform_4(%arg0: i32, %arg1: i32) -> (i32, i32, i32) {
    %c0_i32 = arith.constant 0 : i32
    %c0_i32_0 = arith.constant 0 : i32
    return %arg0, %c0_i32, %arg1 : i32, i32, i32
  }
}

</mosaic_0001>

<llo_original>
// kernel: attention_block.5
$region0: #{attention_block.5}
  #allocation0 [shape = 'u32[]', space=smem, size = 0x4, offset = 0x4, fixed_abs, tag = 'smem constant byte address 0x4 - core index']
  #allocation1 [shape = 'u32[144,128]{1,0:T(1,128)}', space=vmem, size = 0x12000, scoped, tag = 'internal scratch']
  #allocation2 [shape = 'f32[1,1]{1,0:T(1,128)S(1)}', space=vmem, size = 0x200, scoped, tag = 'scoped memory for attention_block.5']
  #allocation3 [shape = 'f32[1,1]{1,0:T(1,128)S(1)}', space=vmem, size = 0x200, scoped, tag = 'scoped memory for attention_block.5']
  %s0 = inlined_call_operand.vmem [shape: f32[2,4,256], index: 0, kind: input, shape index: {}]
  %s1 = inlined_call_operand.vmem [shape: f32[2,1,256], index: 1, kind: input, shape index: {}]
  %s2 = inlined_call_operand.<no memory space> [shape: f32[1,1], index: 2, kind: input, shape index: {}]
  %s3 = inlined_call_operand.<no memory space> [shape: f32[1,1], index: 3, kind: input, shape index: {}]
  %s4 = inlined_call_operand.vmem [shape: f32[2,4,256], index: 4, kind: output, shape index: {}]
  %s5 = sld [smem:[#allocation0]]
  $region49: #{attention_block.5} parent=0
    _
  %s7 = ssub.s32 1, %s5
  %s8 = scalar_select 0, %s7, %s5
  %v9 = vstv %s2
  %10 = vst [vmem:[#allocation2] sm:$0x1] %v9
  %v11 = vstv %s3
  %12 = vst [vmem:[#allocation3] sm:$0x1] %v11
  loop: start=0, step=1, limit=4
  $region2: #{attention_block.5} parent=0 // loop_pre_header
    _
  $region3: #{attention_block.5} parent=0 // loop_header
    %s14 = sphi 0, %s18
    %p15 = scmp.ge.s32.totalorder %s14, 4
    %s21 = sphi 0, %s33
    %s22 = sphi 0, %s29
    %s23 = sphi 0, %s21
    %s24 = sphi 0, %s22
    %s25 = sphi 0, %s23
    %s26 = sphi 0, %s24
    %s38 = sphi 0, %s40
    %s41 = sphi 0, %s38
    %s42 = sphi 0, %s41
    %s58 = sphi 0, %s42
    %s66 = sphi 0, %s68
    %s69 = sphi 0, %s66
    %s70 = sphi 0, %s69
    %s86 = sphi 0, %s70
    %s90 = sphi 0, %s90
    %s92 = sphi 0, %s90
    %s93 = sphi 0, %s92
    %s107 = sphi 0, %s93
    %s111 = sphi 0, %s111
    %s113 = sphi 0, %s111
    %s114 = sphi 0, %s113
    %s128 = sphi 0, %s114
    %s136 = sphi 0, %s138
    %s139 = sphi 0, %s136
    %s140 = sphi 0, %s139
    %s156 = sphi 0, %s140
  $region4: #{attention_block.5} parent=0 // loop_header_branch
    %17 = sbr.rel (%p15) target = $region8
  $region5: #{attention_block.5} parent=0 // loop_body
    %s19 = ssub.s32 %s14, 1
    %s20 = ssub.s32 %s14, 2
    %s27 = sadd.s32 1, %s22
    %p28 = scmp.ge.s32.totalorder %s27, 1
    %s29 = scalar_select %p28, 0, %s27
    %s30 = sadd.s32 1, %s21
    %s31 = scalar_select %p28, %s30, %s21
    %p32 = scmp.ge.s32.totalorder %s31, 2
    %s33 = scalar_select %p32, 0, %s31
    %s34 = ssub.s32 %s21, %s33
    %s35 = ssub.s32 %s22, %s29
    %s36 = sor.u32 %s34, %s35
    %p37 = scmp.eq.s32.totalorder %s36, 0
    %s39 = sadd.s32 %s38, 1
    %s40 = scalar_select %p37, %s38, %s39
    %p43 = pneg %p37
    %p44 = scmp.eq.s32.totalorder %s14, 1
    %p45 = por %p43, %p44
    %p46 = scmp.ne.s32.totalorder %s38, %s41
    %p47 = scmp.eq.s32.totalorder %s14, 0
    %p48 = por %p46, %p47
    %p49 = scmp.ne.s32.totalorder %s38, %s41
    %p50 = scmp.eq.s32.totalorder %s19, 1
    %p51 = por %p49, %p50
    %p52 = scmp.ne.s32.totalorder %s41, %s42
    %p53 = scmp.eq.s32.totalorder %s19, 0
    %p54 = por %p52, %p53
    %p55 = scmp.ne.s32.totalorder %s41, %s42
    %p56 = scmp.eq.s32.totalorder %s20, 1
    %p57 = por %p55, %p56
    %p59 = scmp.ne.s32.totalorder %s42, %s58
    %p60 = scmp.eq.s32.totalorder %s20, 0
    %p61 = por %p59, %p60
    %s62 = ssub.s32 %s21, %s33
    %s63 = ssub.s32 %s22, %s29
    %s64 = sor.u32 %s62, %s63
    %p65 = scmp.eq.s32.totalorder %s64, 0
    %s67 = sadd.s32 %s66, 1
    %s68 = scalar_select %p65, %s66, %s67
    %p71 = pneg %p65
    %p72 = scmp.eq.s32.totalorder %s14, 1
    %p73 = por %p71, %p72
    %p74 = scmp.ne.s32.totalorder %s66, %s69
    %p75 = scmp.eq.s32.totalorder %s14, 0
    %p76 = por %p74, %p75
    %p77 = scmp.ne.s32.totalorder %s66, %s69
    %p78 = scmp.eq.s32.totalorder %s19, 1
    %p79 = por %p77, %p78
    %p80 = scmp.ne.s32.totalorder %s69, %s70
    %p81 = scmp.eq.s32.totalorder %s19, 0
    %p82 = por %p80, %p81
    %p83 = scmp.ne.s32.totalorder %s69, %s70
    %p84 = scmp.eq.s32.totalorder %s20, 1
    %p85 = por %p83, %p84
    %p87 = scmp.ne.s32.totalorder %s70, %s86
    %p88 = scmp.eq.s32.totalorder %s20, 0
    %p89 = por %p87, %p88
    %s91 = sadd.s32 %s90, 1
    %p94 = scmp.eq.s32.totalorder %s14, 1
    %p95 = scmp.ne.s32.totalorder %s90, %s92
    %p96 = scmp.eq.s32.totalorder %s14, 0
    %p97 = por %p95, %p96
    %p98 = scmp.ne.s32.totalorder %s90, %s92
    %p99 = scmp.eq.s32.totalorder %s19, 1
    %p100 = por %p98, %p99
    %p101 = scmp.ne.s32.totalorder %s92, %s93
    %p102 = scmp.eq.s32.totalorder %s19, 0
    %p103 = por %p101, %p102
    %p104 = scmp.ne.s32.totalorder %s92, %s93
    %p105 = scmp.eq.s32.totalorder %s20, 1
    %p106 = por %p104, %p105
    %p108 = scmp.ne.s32.totalorder %s93, %s107
    %p109 = scmp.eq.s32.totalorder %s20, 0
    %p110 = por %p108, %p109
    %s112 = sadd.s32 %s111, 1
    %p115 = scmp.eq.s32.totalorder %s14, 1
    %p116 = scmp.ne.s32.totalorder %s111, %s113
    %p117 = scmp.eq.s32.totalorder %s14, 0
    %p118 = por %p116, %p117
    %p119 = scmp.ne.s32.totalorder %s111, %s113
    %p120 = scmp.eq.s32.totalorder %s19, 1
    %p121 = por %p119, %p120
    %p122 = scmp.ne.s32.totalorder %s113, %s114
    %p123 = scmp.eq.s32.totalorder %s19, 0
    %p124 = por %p122, %p123
    %p125 = scmp.ne.s32.totalorder %s113, %s114
    %p126 = scmp.eq.s32.totalorder %s20, 1
    %p127 = por %p125, %p126
    %p129 = scmp.ne.s32.totalorder %s114, %s128
    %p130 = scmp.eq.s32.totalorder %s20, 0
    %p131 = por %p129, %p130
    %s132 = ssub.s32 %s21, %s33
    %s133 = ssub.s32 %s22, %s29
    %s134 = sor.u32 %s132, %s133
    %p135 = scmp.eq.s32.totalorder %s134, 0
    %s137 = sadd.s32 %s136, 1
    %s138 = scalar_select %p135, %s136, %s137
    %p141 = pneg %p135
    %p142 = scmp.eq.s32.totalorder %s14, 1
    %p143 = por %p141, %p142
    %p144 = scmp.ne.s32.totalorder %s136, %s139
    %p145 = scmp.eq.s32.totalorder %s14, 0
    %p146 = por %p144, %p145
    %p147 = scmp.ne.s32.totalorder %s136, %s139
    %p148 = scmp.eq.s32.totalorder %s19, 1
    %p149 = por %p147, %p148
    %p150 = scmp.ne.s32.totalorder %s139, %s140
    %p151 = scmp.eq.s32.totalorder %s19, 0
    %p152 = por %p150, %p151
    %p153 = scmp.ne.s32.totalorder %s139, %s140
    %p154 = scmp.eq.s32.totalorder %s20, 1
    %p155 = por %p153, %p154
    %p157 = scmp.ne.s32.totalorder %s140, %s156
    %p158 = scmp.eq.s32.totalorder %s20, 0
    %p159 = por %p157, %p158
    %p160 = scmp.le.s32.totalorder 1, %s14
    %p161 = scmp.lt.s32.totalorder %s14, 3
    %p162 = pnand %p160, %p161
    %p163 = pneg %p162
    // Predicated region
    $region9: #{attention_block.5} parent=5 // pred_check
      _
    $region10: #{attention_block.5} parent=5 // pred_check_branch
      %165 = sbr.rel (%p162) target = $region12
    $region11: #{attention_block.5} parent=5 // pred_region
      %s166 = ssub.s32 %s14, 1
      // Predicated region
      $region13: #{attention_block.5} parent=11 // pred_check
        %p167 = pneg %p103
      $region14: #{attention_block.5} parent=11 // pred_check_branch
        %169 = sbr.rel (%p167) target = $region16
      $region15: #{attention_block.5} parent=11 // pred_region
        _
      $region16: #{attention_block.5} parent=11 // pred_fallthru
        _
      // Predicated region
      $region17: #{attention_block.5} parent=11 // pred_check
        %p170 = pneg %p124
      $region18: #{attention_block.5} parent=11 // pred_check_branch
        %172 = sbr.rel (%p170) target = $region20
      $region19: #{attention_block.5} parent=11 // pred_region
        _
      $region20: #{attention_block.5} parent=11 // pred_fallthru
        _
    $region12: #{attention_block.5} parent=5 // pred_fallthru
      _
    %p173 = scmp.lt.s32.totalorder %s14, 2
    // Predicated region
    $region21: #{attention_block.5} parent=5 // pred_check
      %p174 = pneg %p173
    $region22: #{attention_block.5} parent=5 // pred_check_branch
      %176 = sbr.rel (%p174) target = $region24
    $region23: #{attention_block.5} parent=5 // pred_region
      // Predicated region
      $region25: #{attention_block.5} parent=23 // pred_check
        %p177 = pneg %p48
      $region26: #{attention_block.5} parent=23 // pred_check_branch
        %179 = sbr.rel (%p177) target = $region28
      $region27: #{attention_block.5} parent=23 // pred_region
        %s180 = smul.u32 2, %s22
        %p181 = scmp.lt.s32.totalorder %s21, 1
        %s182 = scalar_select %p181, %s21, 1
        %p183 = scmp.lt.s32.totalorder %s180, 1
        %s184 = scalar_select %p183, %s180, 1
        %s185 = smul.addr %s182, 2
        %s186 = sadd.s32 %s184, %s185
        %s187 = smul.addr %s186, 4
        %s188 = scalar_lea.vmem %s0, %s187
        %s189 = smul.u32 2, %s22
      $region28: #{attention_block.5} parent=23 // pred_fallthru
        _
      // Predicated region
      $region29: #{attention_block.5} parent=23 // pred_check
        %p190 = pneg %p76
      $region30: #{attention_block.5} parent=23 // pred_check_branch
        %192 = sbr.rel (%p190) target = $region32
      $region31: #{attention_block.5} parent=23 // pred_region
        %s193 = smul.u32 2, %s22
        %p194 = scmp.lt.s32.totalorder %s21, 1
        %s195 = scalar_select %p194, %s21, 1
        %p196 = scmp.lt.s32.totalorder %s193, 1
        %s197 = scalar_select %p196, %s193, 1
        %s198 = smul.addr %s195, 2
        %s199 = sadd.s32 %s197, %s198
        %s200 = scalar_lea.vmem %s1, %s199
        %s201 = smul.u32 2, %s22
      $region32: #{attention_block.5} parent=23 // pred_fallthru
        _
    $region24: #{attention_block.5} parent=5 // pred_fallthru
      _
    %p202 = scmp.le.s32.totalorder 1, %s14
    %p203 = scmp.lt.s32.totalorder %s14, 3
    %p204 = pnand %p202, %p203
    %p205 = pneg %p204
    // Predicated region
    $region33: #{attention_block.5} parent=5 // pred_check
      _
    $region34: #{attention_block.5} parent=5 // pred_check_branch
      %207 = sbr.rel (%p204) target = $region36
    $region35: #{attention_block.5} parent=5 // pred_region
      %s208 = ssub.s32 %s14, 1
      %s209 = smul.u32 2, %s24
      %p210 = scmp.lt.s32.totalorder %s23, 1
      %s211 = scalar_select %p210, %s23, 1
      %p212 = scmp.lt.s32.totalorder %s209, 1
      %s213 = scalar_select %p212, %s209, 1
      %s214 = smul.addr %s211, 2
      %s215 = sadd.s32 %s213, %s214
      %s216 = smul.addr %s215, 4
      %s217 = scalar_lea.vmem %s0, %s216
      %p218 = pneg %p54
      %p219 = pneg %p51
      %s220 = smul.u32 2, %s24
      %p221 = scmp.lt.s32.totalorder %s23, 1
      %s222 = scalar_select %p221, %s23, 1
      %p223 = scmp.lt.s32.totalorder %s220, 1
      %s224 = scalar_select %p223, %s220, 1
      %s225 = smul.addr %s222, 2
      %s226 = sadd.s32 %s224, %s225
      %s227 = scalar_lea.vmem %s1, %s226
      %p228 = pneg %p82
      %p229 = pneg %p79
      %p230 = pneg %p103
      %p231 = pneg %p100
      %p232 = pneg %p124
      %p233 = pneg %p121
      %p234 = pneg %p152
      %p235 = pneg %p149
      %s236 = smul.u32 2, %s24
      %p237 = scmp.lt.s32.totalorder %s23, 1
      %s238 = scalar_select %p237, %s23, 1
      %p239 = scmp.lt.s32.totalorder %s236, 1
      %s240 = scalar_select %p239, %s236, 1
      %s241 = smul.addr %s238, 2
      %s242 = sadd.s32 %s240, %s241
      %s243 = smul.addr %s242, 4
      %s244 = scalar_lea.vmem %s4, %s243
      %s245 = smul.u32 2, %s24
      %p246 = scmp.lt.s32.totalorder %s23, 1
      %s247 = scalar_select %p246, %s23, 1
      %p248 = scmp.lt.s32.totalorder %s245, 1
      %s249 = scalar_select %p248, %s245, 1
      %s250 = smul.addr %s247, 2
      %s251 = sadd.s32 %s249, %s250
      %s252 = smul.addr %s251, 4
      %s253 = scalar_lea.vmem %s0, %s252
      %s254 = smul.u32 2, %s24
      %s255 = smul.u32 2, %s24
      %p256 = scmp.lt.s32.totalorder %s23, 1
      %s257 = scalar_select %p256, %s23, 1
      %p258 = scmp.lt.s32.totalorder %s255, 1
      %s259 = scalar_select %p258, %s255, 1
      %s260 = smul.addr %s257, 2
      %s261 = sadd.s32 %s259, %s260
      %s262 = scalar_lea.vmem %s1, %s261
      %s263 = smul.u32 2, %s24
      %s264 = smul.u32 2, %s24
      %p265 = scmp.lt.s32.totalorder %s23, 1
      %s266 = scalar_select %p265, %s23, 1
      %p267 = scmp.lt.s32.totalorder %s264, 1
      %s268 = scalar_select %p267, %s264, 1
      %s269 = smul.addr %s266, 2
      %s270 = sadd.s32 %s268, %s269
      %s271 = smul.addr %s270, 4
      %s272 = scalar_lea.vmem %s4, %s271
      %s273 = smul.u32 2, %s24
      %v274 = vld [vmem:[%s262] sm:$0x3]
      %v275 = vld [vmem:[#allocation2] sm:$0x1]
      %277 = vset.pattern.permute.xlu0 0
      %278 = vperm.xlu0 %277, %v275
      %v279 = vpop.permute.xlu0 %278
      %v281 = vlaneseq
      %v282 = vshrl.u32 %v281, 7
      %v283 = vsub.s32 0, %v282
      %v284 = vrot.slane %v279, %v283
      %v285 = vmul.f32 %v274, %v284
      %v286 = vld [vmem:[#allocation3] sm:$0x1]
      %288 = vset.pattern.permute.xlu0 0
      %289 = vperm.xlu0 %288, %v286
      %v290 = vpop.permute.xlu0 %289
      %v292 = vlaneseq
      %v293 = vshrl.u32 %v292, 7
      %v294 = vsub.s32 0, %v293
      %v295 = vrot.slane %v290, %v294
      %v296 = vadd.f32 %v285, %v295
      %v297 = vsub.f32 0.0, %v296
      %v298 = vmul.f32 %v297, 1.442695
      %v299 = vpow.pop %v298
      %v300 = vadd.f32 %v299, 1.0
      %v301 = vrcp.pop %v300
      %v302 = vmul.f32 1.0, %v301
      %v303 = vld [vmem:[%s253] sm:$0xff]
      %v305 = vlaneseq
      %v306 = vshrl.u32 %v305, 7
      %v307 = vsub.s32 0, %v306
      %v308 = vrot.slane %v302, %v307
      %v309 = vlaneseq
      %v310 = vshrl.u32 %v309, 7
      %v311 = vsub.s32 1, %v310
      %v312 = vrot.slane %v302, %v311
      %v313 = vcombine.low %v308, %v312
      %v315 = vmul.f32 %v303, %v313
      %316 = vst [vmem:[%s272] sm:$0xff] %v315
      %s317 = smul.u32 2, %s24
      %p318 = scmp.lt.s32.totalorder %s23, 1
      %s319 = scalar_select %p318, %s23, 1
      %p320 = scmp.lt.s32.totalorder %s317, 1
      %s321 = scalar_select %p320, %s317, 1
      %s322 = smul.addr %s319, 2
      %s323 = sadd.s32 %s321, %s322
      %s324 = smul.addr %s323, 4
      %s325 = scalar_lea.vmem %s4, %s324
      // Predicated region
      $region37: #{attention_block.5} parent=35 // pred_check
        %p326 = pneg %p149
      $region38: #{attention_block.5} parent=35 // pred_check_branch
        %328 = sbr.rel (%p326) target = $region40
      $region39: #{attention_block.5} parent=35 // pred_region
        %s329 = smul.u32 2, %s24
      $region40: #{attention_block.5} parent=35 // pred_fallthru
        _
    $region36: #{attention_block.5} parent=5 // pred_fallthru
      _
    %p330 = scmp.le.s32.totalorder 2, %s14
    // Predicated region
    $region41: #{attention_block.5} parent=5 // pred_check
      %p331 = pneg %p330
    $region42: #{attention_block.5} parent=5 // pred_check_branch
      %333 = sbr.rel (%p331) target = $region44
    $region43: #{attention_block.5} parent=5 // pred_region
      %s334 = ssub.s32 %s14, 2
      // Predicated region
      $region45: #{attention_block.5} parent=43 // pred_check
        %p335 = pneg %p155
      $region46: #{attention_block.5} parent=43 // pred_check_branch
        %337 = sbr.rel (%p335) target = $region48
      $region47: #{attention_block.5} parent=43 // pred_region
        %s338 = smul.u32 2, %s26
        %p339 = scmp.lt.s32.totalorder %s25, 1
        %s340 = scalar_select %p339, %s25, 1
        %p341 = scmp.lt.s32.totalorder %s338, 1
        %s342 = scalar_select %p341, %s338, 1
        %s343 = smul.addr %s340, 2
        %s344 = sadd.s32 %s342, %s343
        %s345 = smul.addr %s344, 4
        %s346 = scalar_lea.vmem %s4, %s345
      $region48: #{attention_block.5} parent=43 // pred_fallthru
        _
    $region44: #{attention_block.5} parent=5 // pred_fallthru
      _
  $region6: #{attention_block.5} parent=0 // loop_footer
    %s18 = sadd.s32 1, %s14
  $region7: #{attention_block.5} parent=0 // loop_footer_branch
    %13 = sbr.rel target = $region3
  $region8: #{attention_block.5} parent=0 // loop_exit
    _

// kernel: attention_block.3
$region0: #{attention_block.3}
  #allocation0 [shape = 'u32[]', space=smem, size = 0x4, offset = 0x4, fixed_abs, tag = 'smem constant byte address 0x4 - core index']
  #allocation1 [shape = 'u32[144,128]{1,0:T(1,128)}', space=vmem, size = 0x12000, scoped, tag = 'internal scratch']
  %s0 = inlined_call_operand.vmem [shape: f32[2,4,256], index: 0, kind: input, shape index: {}]
  %s1 = inlined_call_operand.vmem [shape: f32[2,4,256], index: 1, kind: input, shape index: {}]
  %s2 = inlined_call_operand.vmem [shape: f32[2,1,4,4], index: 2, kind: output, shape index: {0}]
  %s3 = inlined_call_operand.vmem [shape: f32[2,1,4,1], index: 3, kind: output, shape index: {1}]
  %s4 = inlined_call_operand.vmem [shape: f32[2,1,4,4], index: 4, kind: output, shape index: {2}]
  %s5 = inlined_call_operand.vmem [shape: f32[2,1,4,1], index: 5, kind: output, shape index: {3}]
  %6 = xla_tuple %s2, %s3, %s4, %s5
  %s7 = sld [smem:[#allocation0]]
  $region65: #{attention_block.3} parent=0
    _
  %s9 = ssub.s32 1, %s7
  %s10 = scalar_select 0, %s9, %s7
  loop: start=0, step=1, limit=4
  $region2: #{attention_block.3} parent=0 // loop_pre_header
    _
  $region3: #{attention_block.3} parent=0 // loop_header
    %s12 = sphi 0, %s16
    %p13 = scmp.ge.s32.totalorder %s12, 4
    %s19 = sphi 0, %s31
    %s20 = sphi 0, %s27
    %s21 = sphi 0, %s19
    %s22 = sphi 0, %s20
    %s23 = sphi 0, %s21
    %s24 = sphi 0, %s22
    %s36 = sphi 0, %s38
    %s39 = sphi 0, %s36
    %s40 = sphi 0, %s39
    %s56 = sphi 0, %s40
    %s64 = sphi 0, %s66
    %s67 = sphi 0, %s64
    %s68 = sphi 0, %s67
    %s84 = sphi 0, %s68
    %s92 = sphi 0, %s94
    %s95 = sphi 0, %s92
    %s96 = sphi 0, %s95
    %s112 = sphi 0, %s96
    %s120 = sphi 0, %s122
    %s123 = sphi 0, %s120
    %s124 = sphi 0, %s123
    %s140 = sphi 0, %s124
    %s148 = sphi 0, %s150
    %s151 = sphi 0, %s148
    %s152 = sphi 0, %s151
    %s168 = sphi 0, %s152
    %s176 = sphi 0, %s178
    %s179 = sphi 0, %s176
    %s180 = sphi 0, %s179
    %s196 = sphi 0, %s180
  $region4: #{attention_block.3} parent=0 // loop_header_branch
    %15 = sbr.rel (%p13) target = $region8
  $region5: #{attention_block.3} parent=0 // loop_body
    %s17 = ssub.s32 %s12, 1
    %s18 = ssub.s32 %s12, 2
    %s25 = sadd.s32 1, %s20
    %p26 = scmp.ge.s32.totalorder %s25, 1
    %s27 = scalar_select %p26, 0, %s25
    %s28 = sadd.s32 1, %s19
    %s29 = scalar_select %p26, %s28, %s19
    %p30 = scmp.ge.s32.totalorder %s29, 2
    %s31 = scalar_select %p30, 0, %s29
    %s32 = ssub.s32 %s19, %s31
    %s33 = ssub.s32 %s20, %s27
    %s34 = sor.u32 %s32, %s33
    %p35 = scmp.eq.s32.totalorder %s34, 0
    %s37 = sadd.s32 %s36, 1
    %s38 = scalar_select %p35, %s36, %s37
    %p41 = pneg %p35
    %p42 = scmp.eq.s32.totalorder %s12, 1
    %p43 = por %p41, %p42
    %p44 = scmp.ne.s32.totalorder %s36, %s39
    %p45 = scmp.eq.s32.totalorder %s12, 0
    %p46 = por %p44, %p45
    %p47 = scmp.ne.s32.totalorder %s36, %s39
    %p48 = scmp.eq.s32.totalorder %s17, 1
    %p49 = por %p47, %p48
    %p50 = scmp.ne.s32.totalorder %s39, %s40
    %p51 = scmp.eq.s32.totalorder %s17, 0
    %p52 = por %p50, %p51
    %p53 = scmp.ne.s32.totalorder %s39, %s40
    %p54 = scmp.eq.s32.totalorder %s18, 1
    %p55 = por %p53, %p54
    %p57 = scmp.ne.s32.totalorder %s40, %s56
    %p58 = scmp.eq.s32.totalorder %s18, 0
    %p59 = por %p57, %p58
    %s60 = ssub.s32 %s19, %s31
    %s61 = ssub.s32 %s20, %s27
    %s62 = sor.u32 %s60, %s61
    %p63 = scmp.eq.s32.totalorder %s62, 0
    %s65 = sadd.s32 %s64, 1
    %s66 = scalar_select %p63, %s64, %s65
    %p69 = pneg %p63
    %p70 = scmp.eq.s32.totalorder %s12, 1
    %p71 = por %p69, %p70
    %p72 = scmp.ne.s32.totalorder %s64, %s67
    %p73 = scmp.eq.s32.totalorder %s12, 0
    %p74 = por %p72, %p73
    %p75 = scmp.ne.s32.totalorder %s64, %s67
    %p76 = scmp.eq.s32.totalorder %s17, 1
    %p77 = por %p75, %p76
    %p78 = scmp.ne.s32.totalorder %s67, %s68
    %p79 = scmp.eq.s32.totalorder %s17, 0
    %p80 = por %p78, %p79
    %p81 = scmp.ne.s32.totalorder %s67, %s68
    %p82 = scmp.eq.s32.totalorder %s18, 1
    %p83 = por %p81, %p82
    %p85 = scmp.ne.s32.totalorder %s68, %s84
    %p86 = scmp.eq.s32.totalorder %s18, 0
    %p87 = por %p85, %p86
    %s88 = ssub.s32 %s19, %s31
    %s89 = ssub.s32 %s20, %s27
    %s90 = sor.u32 %s88, %s89
    %p91 = scmp.eq.s32.totalorder %s90, 0
    %s93 = sadd.s32 %s92, 1
    %s94 = scalar_select %p91, %s92, %s93
    %p97 = pneg %p91
    %p98 = scmp.eq.s32.totalorder %s12, 1
    %p99 = por %p97, %p98
    %p100 = scmp.ne.s32.totalorder %s92, %s95
    %p101 = scmp.eq.s32.totalorder %s12, 0
    %p102 = por %p100, %p101
    %p103 = scmp.ne.s32.totalorder %s92, %s95
    %p104 = scmp.eq.s32.totalorder %s17, 1
    %p105 = por %p103, %p104
    %p106 = scmp.ne.s32.totalorder %s95, %s96
    %p107 = scmp.eq.s32.totalorder %s17, 0
    %p108 = por %p106, %p107
    %p109 = scmp.ne.s32.totalorder %s95, %s96
    %p110 = scmp.eq.s32.totalorder %s18, 1
    %p111 = por %p109, %p110
    %p113 = scmp.ne.s32.totalorder %s96, %s112
    %p114 = scmp.eq.s32.totalorder %s18, 0
    %p115 = por %p113, %p114
    %s116 = ssub.s32 %s19, %s31
    %s117 = ssub.s32 %s20, %s27
    %s118 = sor.u32 %s116, %s117
    %p119 = scmp.eq.s32.totalorder %s118, 0
    %s121 = sadd.s32 %s120, 1
    %s122 = scalar_select %p119, %s120, %s121
    %p125 = pneg %p119
    %p126 = scmp.eq.s32.totalorder %s12, 1
    %p127 = por %p125, %p126
    %p128 = scmp.ne.s32.totalorder %s120, %s123
    %p129 = scmp.eq.s32.totalorder %s12, 0
    %p130 = por %p128, %p129
    %p131 = scmp.ne.s32.totalorder %s120, %s123
    %p132 = scmp.eq.s32.totalorder %s17, 1
    %p133 = por %p131, %p132
    %p134 = scmp.ne.s32.totalorder %s123, %s124
    %p135 = scmp.eq.s32.totalorder %s17, 0
    %p136 = por %p134, %p135
    %p137 = scmp.ne.s32.totalorder %s123, %s124
    %p138 = scmp.eq.s32.totalorder %s18, 1
    %p139 = por %p137, %p138
    %p141 = scmp.ne.s32.totalorder %s124, %s140
    %p142 = scmp.eq.s32.totalorder %s18, 0
    %p143 = por %p141, %p142
    %s144 = ssub.s32 %s19, %s31
    %s145 = ssub.s32 %s20, %s27
    %s146 = sor.u32 %s144, %s145
    %p147 = scmp.eq.s32.totalorder %s146, 0
    %s149 = sadd.s32 %s148, 1
    %s150 = scalar_select %p147, %s148, %s149
    %p153 = pneg %p147
    %p154 = scmp.eq.s32.totalorder %s12, 1
    %p155 = por %p153, %p154
    %p156 = scmp.ne.s32.totalorder %s148, %s151
    %p157 = scmp.eq.s32.totalorder %s12, 0
    %p158 = por %p156, %p157
    %p159 = scmp.ne.s32.totalorder %s148, %s151
    %p160 = scmp.eq.s32.totalorder %s17, 1
    %p161 = por %p159, %p160
    %p162 = scmp.ne.s32.totalorder %s151, %s152
    %p163 = scmp.eq.s32.totalorder %s17, 0
    %p164 = por %p162, %p163
    %p165 = scmp.ne.s32.totalorder %s151, %s152
    %p166 = scmp.eq.s32.totalorder %s18, 1
    %p167 = por %p165, %p166
    %p169 = scmp.ne.s32.totalorder %s152, %s168
    %p170 = scmp.eq.s32.totalorder %s18, 0
    %p171 = por %p169, %p170
    %s172 = ssub.s32 %s19, %s31
    %s173 = ssub.s32 %s20, %s27
    %s174 = sor.u32 %s172, %s173
    %p175 = scmp.eq.s32.totalorder %s174, 0
    %s177 = sadd.s32 %s176, 1
    %s178 = scalar_select %p175, %s176, %s177
    %p181 = pneg %p175
    %p182 = scmp.eq.s32.totalorder %s12, 1
    %p183 = por %p181, %p182
    %p184 = scmp.ne.s32.totalorder %s176, %s179
    %p185 = scmp.eq.s32.totalorder %s12, 0
    %p186 = por %p184, %p185
    %p187 = scmp.ne.s32.totalorder %s176, %s179
    %p188 = scmp.eq.s32.totalorder %s17, 1
    %p189 = por %p187, %p188
    %p190 = scmp.ne.s32.totalorder %s179, %s180
    %p191 = scmp.eq.s32.totalorder %s17, 0
    %p192 = por %p190, %p191
    %p193 = scmp.ne.s32.totalorder %s179, %s180
    %p194 = scmp.eq.s32.totalorder %s18, 1
    %p195 = por %p193, %p194
    %p197 = scmp.ne.s32.totalorder %s180, %s196
    %p198 = scmp.eq.s32.totalorder %s18, 0
    %p199 = por %p197, %p198
    %p200 = scmp.le.s32.totalorder 1, %s12
    %p201 = scmp.lt.s32.totalorder %s12, 3
    %p202 = pnand %p200, %p201
    %p203 = pneg %p202
    // Predicated region
    $region9: #{attention_block.3} parent=5 // pred_check
      _
    $region10: #{attention_block.3} parent=5 // pred_check_branch
      %205 = sbr.rel (%p202) target = $region12
    $region11: #{attention_block.3} parent=5 // pred_region
      %s206 = ssub.s32 %s12, 1
    $region12: #{attention_block.3} parent=5 // pred_fallthru
      _
    %p207 = scmp.lt.s32.totalorder %s12, 2
    // Predicated region
    $region13: #{attention_block.3} parent=5 // pred_check
      %p208 = pneg %p207
    $region14: #{attention_block.3} parent=5 // pred_check_branch
      %210 = sbr.rel (%p208) target = $region16
    $region15: #{attention_block.3} parent=5 // pred_region
      // Predicated region
      $region17: #{attention_block.3} parent=15 // pred_check
        %p211 = pneg %p46
      $region18: #{attention_block.3} parent=15 // pred_check_branch
        %213 = sbr.rel (%p211) target = $region20
      $region19: #{attention_block.3} parent=15 // pred_region
        %s214 = smul.u32 2, %s20
        %p215 = scmp.lt.s32.totalorder %s19, 1
        %s216 = scalar_select %p215, %s19, 1
        %p217 = scmp.lt.s32.totalorder %s214, 1
        %s218 = scalar_select %p217, %s214, 1
        %s219 = smul.addr %s216, 2
        %s220 = sadd.s32 %s218, %s219
        %s221 = smul.addr %s220, 4
        %s222 = scalar_lea.vmem %s0, %s221
        %s223 = smul.u32 2, %s20
      $region20: #{attention_block.3} parent=15 // pred_fallthru
        _
      // Predicated region
      $region21: #{attention_block.3} parent=15 // pred_check
        %p224 = pneg %p74
      $region22: #{attention_block.3} parent=15 // pred_check_branch
        %226 = sbr.rel (%p224) target = $region24
      $region23: #{attention_block.3} parent=15 // pred_region
        %s227 = smul.u32 2, %s20
        %p228 = scmp.lt.s32.totalorder %s19, 1
        %s229 = scalar_select %p228, %s19, 1
        %p230 = scmp.lt.s32.totalorder %s227, 1
        %s231 = scalar_select %p230, %s227, 1
        %s232 = smul.addr %s229, 2
        %s233 = sadd.s32 %s231, %s232
        %s234 = smul.addr %s233, 4
        %s235 = scalar_lea.vmem %s1, %s234
        %s236 = smul.u32 2, %s20
      $region24: #{attention_block.3} parent=15 // pred_fallthru
        _
    $region16: #{attention_block.3} parent=5 // pred_fallthru
      _
    %p237 = scmp.le.s32.totalorder 1, %s12
    %p238 = scmp.lt.s32.totalorder %s12, 3
    %p239 = pnand %p237, %p238
    %p240 = pneg %p239
    // Predicated region
    $region25: #{attention_block.3} parent=5 // pred_check
      _
    $region26: #{attention_block.3} parent=5 // pred_check_branch
      %242 = sbr.rel (%p239) target = $region28
    $region27: #{attention_block.3} parent=5 // pred_region
      %s243 = ssub.s32 %s12, 1
      %s244 = smul.u32 2, %s22
      %p245 = scmp.lt.s32.totalorder %s21, 1
      %s246 = scalar_select %p245, %s21, 1
      %p247 = scmp.lt.s32.totalorder %s244, 1
      %s248 = scalar_select %p247, %s244, 1
      %s249 = smul.addr %s246, 2
      %s250 = sadd.s32 %s248, %s249
      %s251 = smul.addr %s250, 4
      %s252 = scalar_lea.vmem %s0, %s251
      %p253 = pneg %p52
      %p254 = pneg %p49
      %s255 = smul.u32 2, %s22
      %p256 = scmp.lt.s32.totalorder %s21, 1
      %s257 = scalar_select %p256, %s21, 1
      %p258 = scmp.lt.s32.totalorder %s255, 1
      %s259 = scalar_select %p258, %s255, 1
      %s260 = smul.addr %s257, 2
      %s261 = sadd.s32 %s259, %s260
      %s262 = smul.addr %s261, 4
      %s263 = scalar_lea.vmem %s1, %s262
      %p264 = pneg %p80
      %p265 = pneg %p77
      %p266 = pneg %p108
      %p267 = pneg %p105
      %p268 = scmp.lt.s32.totalorder %s21, 1
      %s269 = scalar_select %p268, %s21, 1
      %p270 = scmp.lt.s32.totalorder %s22, 0
      %s271 = scalar_select %p270, %s22, 0
      %s272 = sadd.s32 %s271, %s269
      %s273 = smul.addr %s272, 4
      %s274 = scalar_lea.vmem %s2, %s273
      %p275 = pneg %p136
      %p276 = pneg %p133
      %p277 = scmp.lt.s32.totalorder %s21, 1
      %s278 = scalar_select %p277, %s21, 1
      %p279 = scmp.lt.s32.totalorder %s22, 0
      %s280 = scalar_select %p279, %s22, 0
      %s281 = sadd.s32 %s280, %s278
      %s282 = smul.addr %s281, 4
      %s283 = scalar_lea.vmem %s3, %s282
      %p284 = pneg %p164
      %p285 = pneg %p161
      %p286 = scmp.lt.s32.totalorder %s21, 1
      %s287 = scalar_select %p286, %s21, 1
      %p288 = scmp.lt.s32.totalorder %s22, 0
      %s289 = scalar_select %p288, %s22, 0
      %s290 = sadd.s32 %s289, %s287
      %s291 = smul.addr %s290, 4
      %s292 = scalar_lea.vmem %s4, %s291
      %p293 = pneg %p192
      %p294 = pneg %p189
      %p295 = scmp.lt.s32.totalorder %s21, 1
      %s296 = scalar_select %p295, %s21, 1
      %p297 = scmp.lt.s32.totalorder %s22, 0
      %s298 = scalar_select %p297, %s22, 0
      %s299 = sadd.s32 %s298, %s296
      %s300 = smul.addr %s299, 4
      %s301 = scalar_lea.vmem %s5, %s300
      %s302 = smul.u32 2, %s22
      %p303 = scmp.lt.s32.totalorder %s21, 1
      %s304 = scalar_select %p303, %s21, 1
      %p305 = scmp.lt.s32.totalorder %s302, 1
      %s306 = scalar_select %p305, %s302, 1
      %s307 = smul.addr %s304, 2
      %s308 = sadd.s32 %s306, %s307
      %s309 = smul.addr %s308, 4
      %s310 = scalar_lea.vmem %s0, %s309
      %s311 = smul.u32 2, %s22
      %s312 = smul.u32 2, %s22
      %p313 = scmp.lt.s32.totalorder %s21, 1
      %s314 = scalar_select %p313, %s21, 1
      %p315 = scmp.lt.s32.totalorder %s312, 1
      %s316 = scalar_select %p315, %s312, 1
      %s317 = smul.addr %s314, 2
      %s318 = sadd.s32 %s316, %s317
      %s319 = smul.addr %s318, 4
      %s320 = scalar_lea.vmem %s1, %s319
      %s321 = smul.u32 2, %s22
      %p322 = scmp.lt.s32.totalorder %s21, 1
      %s323 = scalar_select %p322, %s21, 1
      %p324 = scmp.lt.s32.totalorder %s22, 0
      %s325 = scalar_select %p324, %s22, 0
      %s326 = sadd.s32 %s325, %s323
      %s327 = smul.addr %s326, 4
      %s328 = scalar_lea.vmem %s2, %s327
      %p329 = scmp.lt.s32.totalorder %s21, 1
      %s330 = scalar_select %p329, %s21, 1
      %p331 = scmp.lt.s32.totalorder %s22, 0
      %s332 = scalar_select %p331, %s22, 0
      %s333 = sadd.s32 %s332, %s330
      %s334 = smul.addr %s333, 4
      %s335 = scalar_lea.vmem %s3, %s334
      %p336 = scmp.lt.s32.totalorder %s21, 1
      %s337 = scalar_select %p336, %s21, 1
      %p338 = scmp.lt.s32.totalorder %s22, 0
      %s339 = scalar_select %p338, %s22, 0
      %s340 = sadd.s32 %s339, %s337
      %s341 = smul.addr %s340, 4
      %s342 = scalar_lea.vmem %s4, %s341
      %p343 = scmp.lt.s32.totalorder %s21, 1
      %s344 = scalar_select %p343, %s21, 1
      %p345 = scmp.lt.s32.totalorder %s22, 0
      %s346 = scalar_select %p345, %s22, 0
      %s347 = sadd.s32 %s346, %s344
      %s348 = smul.addr %s347, 4
      %s349 = scalar_lea.vmem %s5, %s348
      %v350 = vld [vmem:[%s310] sm:$0xff]
      %v351 = vld [vmem:[%s320] sm:$0xff]
      %v353 = vcombine.high %v350, %v350
      %355 = vmatprep.subr.mxu0 0.0
      %356 = vmatpush1.xpose.msra.mxu0 0.0
      %357 = vmatprep.subr.mxu0 0.0
      %358 = vmatpush1.xpose.msra.mxu0 0.0
      %359 = vmatprep.subr.mxu0 0.0
      %360 = vmatpush1.xpose.msra.mxu0 0.0
      %361 = vmatprep.subr.mxu0 0.0
      %362 = vmatpush1.xpose.msra.mxu0 0.0
      %363 = vmatprep.subr.mxu0 0.0
      %364 = vmatpush1.xpose.msra.mxu0 0.0
      %365 = vmatprep.subr.mxu0 0.0
      %366 = vmatpush1.xpose.msra.mxu0 0.0
      %367 = vmatprep.subr.mxu0 0.0
      %368 = vmatpush1.xpose.msra.mxu0 0.0
      %369 = vmatprep.subr.mxu0 0.0
      %370 = vmatpush1.xpose.msra.mxu0 0.0
      %371 = vmatprep.subr.mxu0 0.0
      %372 = vmatpush1.xpose.msra.mxu0 0.0
      %373 = vmatprep.subr.mxu0 0.0
      %374 = vmatpush1.xpose.msra.mxu0 0.0
      %375 = vmatprep.subr.mxu0 0.0
      %376 = vmatpush1.xpose.msra.mxu0 0.0
      %377 = vmatprep.subr.mxu0 0.0
      %378 = vmatpush1.xpose.msra.mxu0 0.0
      %379 = vmatprep.subr.mxu0 0.0
      %380 = vmatpush1.xpose.msra.mxu0 0.0
      %381 = vmatprep.subr.mxu0 0.0
      %382 = vmatpush1.xpose.msra.mxu0 0.0
      %383 = vmatprep.subr.mxu0 0.0
      %384 = vmatpush1.xpose.msra.mxu0 0.0
      %385 = vmatprep.subr.mxu0 %v353
      %386 = vmatpush1.xpose.msra.mxu0 %v350
      %387 = vmatprep.subr.mxu0 0.0
      %388 = vmatpush2.xpose.msra.mxu0 0.0
      %389 = vmatprep.subr.mxu0 0.0
      %390 = vmatpush2.xpose.msra.mxu0 0.0
      %391 = vmatprep.subr.mxu0 0.0
      %392 = vmatpush2.xpose.msra.mxu0 0.0
      %393 = vmatprep.subr.mxu0 0.0
      %394 = vmatpush2.xpose.msra.mxu0 0.0
      %395 = vmatprep.subr.mxu0 0.0
      %396 = vmatpush2.xpose.msra.mxu0 0.0
      %397 = vmatprep.subr.mxu0 0.0
      %398 = vmatpush2.xpose.msra.mxu0 0.0
      %399 = vmatprep.subr.mxu0 0.0
      %400 = vmatpush2.xpose.msra.mxu0 0.0
      %401 = vmatprep.subr.mxu0 0.0
      %402 = vmatpush2.xpose.msra.mxu0 0.0
      %403 = vmatprep.subr.mxu0 0.0
      %404 = vmatpush2.xpose.msra.mxu0 0.0
      %405 = vmatprep.subr.mxu0 0.0
      %406 = vmatpush2.xpose.msra.mxu0 0.0
      %407 = vmatprep.subr.mxu0 0.0
      %408 = vmatpush2.xpose.msra.mxu0 0.0
      %409 = vmatprep.subr.mxu0 0.0
      %410 = vmatpush2.xpose.msra.mxu0 0.0
      %411 = vmatprep.subr.mxu0 0.0
      %412 = vmatpush2.xpose.msra.mxu0 0.0
      %413 = vmatprep.subr.mxu0 0.0
      %414 = vmatpush2.xpose.msra.mxu0 0.0
      %415 = vmatprep.subr.mxu0 0.0
      %416 = vmatpush2.xpose.msra.mxu0 0.0
      %417 = vmatprep.subr.mxu0 0.0
      %418 = vmatpush2.xpose.msra.mxu0 0.0
      %419 = vmatprep.mubr.f32.mxu0 %v353
      %420 = vmatmul.mubr.f32.gmra.mxu0 %v350
      %v421 = vpop.f32.mrf.mxu0
      %v422 = vadd.f32 0.0, %v421
      %v423 = vpop.f32.mrf.mxu0
      %424 = vdwg.mxu0
      %vm425 = vcmask 27648
      %426 = vst.msk [vmem:[%s328] sm:$0xf] %vm425, %v422
      %v428 = vcombine.high %v351, %v351
      %430 = vmatprep.subr.mxu0 0.0
      %431 = vmatpush1.xpose.msra.mxu0 0.0
      %432 = vmatprep.subr.mxu0 0.0
      %433 = vmatpush1.xpose.msra.mxu0 0.0
      %434 = vmatprep.subr.mxu0 0.0
      %435 = vmatpush1.xpose.msra.mxu0 0.0
      %436 = vmatprep.subr.mxu0 0.0
      %437 = vmatpush1.xpose.msra.mxu0 0.0
      %438 = vmatprep.subr.mxu0 0.0
      %439 = vmatpush1.xpose.msra.mxu0 0.0
      %440 = vmatprep.subr.mxu0 0.0
      %441 = vmatpush1.xpose.msra.mxu0 0.0
      %442 = vmatprep.subr.mxu0 0.0
      %443 = vmatpush1.xpose.msra.mxu0 0.0
      %444 = vmatprep.subr.mxu0 0.0
      %445 = vmatpush1.xpose.msra.mxu0 0.0
      %446 = vmatprep.subr.mxu0 0.0
      %447 = vmatpush1.xpose.msra.mxu0 0.0
      %448 = vmatprep.subr.mxu0 0.0
      %449 = vmatpush1.xpose.msra.mxu0 0.0
      %450 = vmatprep.subr.mxu0 0.0
      %451 = vmatpush1.xpose.msra.mxu0 0.0
      %452 = vmatprep.subr.mxu0 0.0
      %453 = vmatpush1.xpose.msra.mxu0 0.0
      %454 = vmatprep.subr.mxu0 0.0
      %455 = vmatpush1.xpose.msra.mxu0 0.0
      %456 = vmatprep.subr.mxu0 0.0
      %457 = vmatpush1.xpose.msra.mxu0 0.0
      %458 = vmatprep.subr.mxu0 0.0
      %459 = vmatpush1.xpose.msra.mxu0 0.0
      %460 = vmatprep.subr.mxu0 %v428
      %461 = vmatpush1.xpose.msra.mxu0 %v351
      %462 = vmatprep.subr.mxu0 0.0
      %463 = vmatpush2.xpose.msra.mxu0 0.0
      %464 = vmatprep.subr.mxu0 0.0
      %465 = vmatpush2.xpose.msra.mxu0 0.0
      %466 = vmatprep.subr.mxu0 0.0
      %467 = vmatpush2.xpose.msra.mxu0 0.0
      %468 = vmatprep.subr.mxu0 0.0
      %469 = vmatpush2.xpose.msra.mxu0 0.0
      %470 = vmatprep.subr.mxu0 0.0
      %471 = vmatpush2.xpose.msra.mxu0 0.0
      %472 = vmatprep.subr.mxu0 0.0
      %473 = vmatpush2.xpose.msra.mxu0 0.0
      %474 = vmatprep.subr.mxu0 0.0
      %475 = vmatpush2.xpose.msra.mxu0 0.0
      %476 = vmatprep.subr.mxu0 0.0
      %477 = vmatpush2.xpose.msra.mxu0 0.0
      %478 = vmatprep.subr.mxu0 0.0
      %479 = vmatpush2.xpose.msra.mxu0 0.0
      %480 = vmatprep.subr.mxu0 0.0
      %481 = vmatpush2.xpose.msra.mxu0 0.0
      %482 = vmatprep.subr.mxu0 0.0
      %483 = vmatpush2.xpose.msra.mxu0 0.0
      %484 = vmatprep.subr.mxu0 0.0
      %485 = vmatpush2.xpose.msra.mxu0 0.0
      %486 = vmatprep.subr.mxu0 0.0
      %487 = vmatpush2.xpose.msra.mxu0 0.0
      %488 = vmatprep.subr.mxu0 0.0
      %489 = vmatpush2.xpose.msra.mxu0 0.0
      %490 = vmatprep.subr.mxu0 0.0
      %491 = vmatpush2.xpose.msra.mxu0 0.0
      %492 = vmatprep.subr.mxu0 0.0
      %493 = vmatpush2.xpose.msra.mxu0 0.0
      %494 = vmatprep.mubr.f32.mxu0 %v428
      %495 = vmatmul.mubr.f32.gmra.mxu0 %v351
      %v496 = vpop.f32.mrf.mxu0
      %v497 = vadd.f32 0.0, %v496
      %v498 = vpop.f32.mrf.mxu0
      %499 = vdwg.mxu0
      %500 = vst.msk [vmem:[%s342] sm:$0xf] %vm425, %v497
      %vm501 = vcmask 1043456
      %v502 = vsel %vm501, %v350, 0.0
      %v503 = vsel %vm501, %v353, 0.0
      %v504 = vadd.f32 %v502, %v503
      %505 = vadd.xlane.f32.xlu0 %v504
      %v506 = vpop.xlane.xlu0 %505
      %vm507 = vcmask 3072
      %508 = vst.msk [vmem:[%s335] sm:$0xf] %vm507, %v506
      %v509 = vsel %vm501, %v351, 0.0
      %v510 = vsel %vm501, %v428, 0.0
      %v511 = vadd.f32 %v509, %v510
      %512 = vadd.xlane.f32.xlu0 %v511
      %v513 = vpop.xlane.xlu0 %512
      %514 = vst.msk [vmem:[%s349] sm:$0xf] %vm507, %v513
      %p515 = scmp.lt.s32.totalorder %s21, 1
      %s516 = scalar_select %p515, %s21, 1
      %p517 = scmp.lt.s32.totalorder %s22, 0
      %s518 = scalar_select %p517, %s22, 0
      %s519 = sadd.s32 %s518, %s516
      %s520 = smul.addr %s519, 4
      %s521 = scalar_lea.vmem %s2, %s520
      %p522 = scmp.lt.s32.totalorder %s21, 1
      %s523 = scalar_select %p522, %s21, 1
      %p524 = scmp.lt.s32.totalorder %s22, 0
      %s525 = scalar_select %p524, %s22, 0
      %s526 = sadd.s32 %s525, %s523
      %s527 = smul.addr %s526, 4
      %s528 = scalar_lea.vmem %s3, %s527
      %p529 = scmp.lt.s32.totalorder %s21, 1
      %s530 = scalar_select %p529, %s21, 1
      %p531 = scmp.lt.s32.totalorder %s22, 0
      %s532 = scalar_select %p531, %s22, 0
      %s533 = sadd.s32 %s532, %s530
      %s534 = smul.addr %s533, 4
      %s535 = scalar_lea.vmem %s4, %s534
      %p536 = scmp.lt.s32.totalorder %s21, 1
      %s537 = scalar_select %p536, %s21, 1
      %p538 = scmp.lt.s32.totalorder %s22, 0
      %s539 = scalar_select %p538, %s22, 0
      %s540 = sadd.s32 %s539, %s537
      %s541 = smul.addr %s540, 4
      %s542 = scalar_lea.vmem %s5, %s541
      // Predicated region
      $region29: #{attention_block.3} parent=27 // pred_check
        %p543 = pneg %p105
      $region30: #{attention_block.3} parent=27 // pred_check_branch
        %545 = sbr.rel (%p543) target = $region32
      $region31: #{attention_block.3} parent=27 // pred_region
        _
      $region32: #{attention_block.3} parent=27 // pred_fallthru
        _
      // Predicated region
      $region33: #{attention_block.3} parent=27 // pred_check
        %p546 = pneg %p133
      $region34: #{attention_block.3} parent=27 // pred_check_branch
        %548 = sbr.rel (%p546) target = $region36
      $region35: #{attention_block.3} parent=27 // pred_region
        _
      $region36: #{attention_block.3} parent=27 // pred_fallthru
        _
      // Predicated region
      $region37: #{attention_block.3} parent=27 // pred_check
        %p549 = pneg %p161
      $region38: #{attention_block.3} parent=27 // pred_check_branch
        %551 = sbr.rel (%p549) target = $region40
      $region39: #{attention_block.3} parent=27 // pred_region
        _
      $region40: #{attention_block.3} parent=27 // pred_fallthru
        _
      // Predicated region
      $region41: #{attention_block.3} parent=27 // pred_check
        %p552 = pneg %p189
      $region42: #{attention_block.3} parent=27 // pred_check_branch
        %554 = sbr.rel (%p552) target = $region44
      $region43: #{attention_block.3} parent=27 // pred_region
        _
      $region44: #{attention_block.3} parent=27 // pred_fallthru
        _
    $region28: #{attention_block.3} parent=5 // pred_fallthru
      _
    %p555 = scmp.le.s32.totalorder 2, %s12
    // Predicated region
    $region45: #{attention_block.3} parent=5 // pred_check
      %p556 = pneg %p555
    $region46: #{attention_block.3} parent=5 // pred_check_branch
      %558 = sbr.rel (%p556) target = $region48
    $region47: #{attention_block.3} parent=5 // pred_region
      %s559 = ssub.s32 %s12, 2
      // Predicated region
      $region49: #{attention_block.3} parent=47 // pred_check
        %p560 = pneg %p111
      $region50: #{attention_block.3} parent=47 // pred_check_branch
        %562 = sbr.rel (%p560) target = $region52
      $region51: #{attention_block.3} parent=47 // pred_region
        %p563 = scmp.lt.s32.totalorder %s23, 1
        %s564 = scalar_select %p563, %s23, 1
        %p565 = scmp.lt.s32.totalorder %s24, 0
        %s566 = scalar_select %p565, %s24, 0
        %s567 = sadd.s32 %s566, %s564
        %s568 = smul.addr %s567, 4
        %s569 = scalar_lea.vmem %s2, %s568
      $region52: #{attention_block.3} parent=47 // pred_fallthru
        _
      // Predicated region
      $region53: #{attention_block.3} parent=47 // pred_check
        %p570 = pneg %p139
      $region54: #{attention_block.3} parent=47 // pred_check_branch
        %572 = sbr.rel (%p570) target = $region56
      $region55: #{attention_block.3} parent=47 // pred_region
        %p573 = scmp.lt.s32.totalorder %s23, 1
        %s574 = scalar_select %p573, %s23, 1
        %p575 = scmp.lt.s32.totalorder %s24, 0
        %s576 = scalar_select %p575, %s24, 0
        %s577 = sadd.s32 %s576, %s574
        %s578 = smul.addr %s577, 4
        %s579 = scalar_lea.vmem %s3, %s578
      $region56: #{attention_block.3} parent=47 // pred_fallthru
        _
      // Predicated region
      $region57: #{attention_block.3} parent=47 // pred_check
        %p580 = pneg %p167
      $region58: #{attention_block.3} parent=47 // pred_check_branch
        %582 = sbr.rel (%p580) target = $region60
      $region59: #{attention_block.3} parent=47 // pred_region
        %p583 = scmp.lt.s32.totalorder %s23, 1
        %s584 = scalar_select %p583, %s23, 1
        %p585 = scmp.lt.s32.totalorder %s24, 0
        %s586 = scalar_select %p585, %s24, 0
        %s587 = sadd.s32 %s586, %s584
        %s588 = smul.addr %s587, 4
        %s589 = scalar_lea.vmem %s4, %s588
      $region60: #{attention_block.3} parent=47 // pred_fallthru
        _
      // Predicated region
      $region61: #{attention_block.3} parent=47 // pred_check
        %p590 = pneg %p195
      $region62: #{attention_block.3} parent=47 // pred_check_branch
        %592 = sbr.rel (%p590) target = $region64
      $region63: #{attention_block.3} parent=47 // pred_region
        %p593 = scmp.lt.s32.totalorder %s23, 1
        %s594 = scalar_select %p593, %s23, 1
        %p595 = scmp.lt.s32.totalorder %s24, 0
        %s596 = scalar_select %p595, %s24, 0
        %s597 = sadd.s32 %s596, %s594
        %s598 = smul.addr %s597, 4
        %s599 = scalar_lea.vmem %s5, %s598
      $region64: #{attention_block.3} parent=47 // pred_fallthru
        _
    $region48: #{attention_block.3} parent=5 // pred_fallthru
      _
  $region6: #{attention_block.3} parent=0 // loop_footer
    %s16 = sadd.s32 1, %s12
  $region7: #{attention_block.3} parent=0 // loop_footer_branch
    %11 = sbr.rel target = $region3
  $region8: #{attention_block.3} parent=0 // loop_exit
    _

// kernel: attention_block.4
$region0: #{attention_block.4}
  #allocation0 [shape = 'u32[]', space=smem, size = 0x4, offset = 0x4, fixed_abs, tag = 'smem constant byte address 0x4 - core index']
  #allocation1 [shape = 'u32[144,128]{1,0:T(1,128)}', space=vmem, size = 0x12000, scoped, tag = 'internal scratch']
  %s0 = inlined_call_operand.vmem [shape: f32[2,4,256], index: 0, kind: input, shape index: {}]
  %s1 = inlined_call_operand.vmem [shape: f32[2,4,256], index: 1, kind: input, shape index: {}]
  %s2 = inlined_call_operand.vmem [shape: f32[8,4], index: 2, kind: input, shape index: {}]
  %s3 = inlined_call_operand.vmem [shape: f32[8,4], index: 3, kind: input, shape index: {}]
  %s4 = inlined_call_operand.vmem [shape: f32[8,1], index: 4, kind: input, shape index: {}]
  %s5 = inlined_call_operand.vmem [shape: f32[8,1], index: 5, kind: input, shape index: {}]
  %s6 = inlined_call_operand.vmem [shape: f32[2,1,256], index: 6, kind: output, shape index: {0}]
  %s7 = inlined_call_operand.vmem [shape: f32[2,1,1,1], index: 7, kind: output, shape index: {1}]
  %s8 = inlined_call_operand.vmem [shape: f32[2,1,1,1], index: 8, kind: output, shape index: {2}]
  %9 = xla_tuple %s6, %s7, %s8
  %s10 = sld [smem:[#allocation0]]
  $region73: #{attention_block.4} parent=0
    _
  %s12 = ssub.s32 1, %s10
  %s13 = scalar_select 0, %s12, %s10
  loop: start=0, step=1, limit=4
  $region2: #{attention_block.4} parent=0 // loop_pre_header
    _
  $region3: #{attention_block.4} parent=0 // loop_header
    %s15 = sphi 0, %s19
    %p16 = scmp.ge.s32.totalorder %s15, 4
    %s22 = sphi 0, %s34
    %s23 = sphi 0, %s30
    %s24 = sphi 0, %s22
    %s25 = sphi 0, %s23
    %s26 = sphi 0, %s24
    %s27 = sphi 0, %s25
    %s39 = sphi 0, %s41
    %s42 = sphi 0, %s39
    %s43 = sphi 0, %s42
    %s59 = sphi 0, %s43
    %s67 = sphi 0, %s69
    %s70 = sphi 0, %s67
    %s71 = sphi 0, %s70
    %s87 = sphi 0, %s71
    %s91 = sphi 0, %s91
    %s93 = sphi 0, %s91
    %s94 = sphi 0, %s93
    %s108 = sphi 0, %s94
    %s112 = sphi 0, %s112
    %s114 = sphi 0, %s112
    %s115 = sphi 0, %s114
    %s129 = sphi 0, %s115
    %s133 = sphi 0, %s133
    %s135 = sphi 0, %s133
    %s136 = sphi 0, %s135
    %s150 = sphi 0, %s136
    %s154 = sphi 0, %s154
    %s156 = sphi 0, %s154
    %s157 = sphi 0, %s156
    %s171 = sphi 0, %s157
    %s179 = sphi 0, %s181
    %s182 = sphi 0, %s179
    %s183 = sphi 0, %s182
    %s199 = sphi 0, %s183
    %s207 = sphi 0, %s209
    %s210 = sphi 0, %s207
    %s211 = sphi 0, %s210
    %s227 = sphi 0, %s211
    %s235 = sphi 0, %s237
    %s238 = sphi 0, %s235
    %s239 = sphi 0, %s238
    %s255 = sphi 0, %s239
  $region4: #{attention_block.4} parent=0 // loop_header_branch
    %18 = sbr.rel (%p16) target = $region8
  $region5: #{attention_block.4} parent=0 // loop_body
    %s20 = ssub.s32 %s15, 1
    %s21 = ssub.s32 %s15, 2
    %s28 = sadd.s32 1, %s23
    %p29 = scmp.ge.s32.totalorder %s28, 1
    %s30 = scalar_select %p29, 0, %s28
    %s31 = sadd.s32 1, %s22
    %s32 = scalar_select %p29, %s31, %s22
    %p33 = scmp.ge.s32.totalorder %s32, 2
    %s34 = scalar_select %p33, 0, %s32
    %s35 = ssub.s32 %s22, %s34
    %s36 = ssub.s32 %s23, %s30
    %s37 = sor.u32 %s35, %s36
    %p38 = scmp.eq.s32.totalorder %s37, 0
    %s40 = sadd.s32 %s39, 1
    %s41 = scalar_select %p38, %s39, %s40
    %p44 = pneg %p38
    %p45 = scmp.eq.s32.totalorder %s15, 1
    %p46 = por %p44, %p45
    %p47 = scmp.ne.s32.totalorder %s39, %s42
    %p48 = scmp.eq.s32.totalorder %s15, 0
    %p49 = por %p47, %p48
    %p50 = scmp.ne.s32.totalorder %s39, %s42
    %p51 = scmp.eq.s32.totalorder %s20, 1
    %p52 = por %p50, %p51
    %p53 = scmp.ne.s32.totalorder %s42, %s43
    %p54 = scmp.eq.s32.totalorder %s20, 0
    %p55 = por %p53, %p54
    %p56 = scmp.ne.s32.totalorder %s42, %s43
    %p57 = scmp.eq.s32.totalorder %s21, 1
    %p58 = por %p56, %p57
    %p60 = scmp.ne.s32.totalorder %s43, %s59
    %p61 = scmp.eq.s32.totalorder %s21, 0
    %p62 = por %p60, %p61
    %s63 = ssub.s32 %s22, %s34
    %s64 = ssub.s32 %s23, %s30
    %s65 = sor.u32 %s63, %s64
    %p66 = scmp.eq.s32.totalorder %s65, 0
    %s68 = sadd.s32 %s67, 1
    %s69 = scalar_select %p66, %s67, %s68
    %p72 = pneg %p66
    %p73 = scmp.eq.s32.totalorder %s15, 1
    %p74 = por %p72, %p73
    %p75 = scmp.ne.s32.totalorder %s67, %s70
    %p76 = scmp.eq.s32.totalorder %s15, 0
    %p77 = por %p75, %p76
    %p78 = scmp.ne.s32.totalorder %s67, %s70
    %p79 = scmp.eq.s32.totalorder %s20, 1
    %p80 = por %p78, %p79
    %p81 = scmp.ne.s32.totalorder %s70, %s71
    %p82 = scmp.eq.s32.totalorder %s20, 0
    %p83 = por %p81, %p82
    %p84 = scmp.ne.s32.totalorder %s70, %s71
    %p85 = scmp.eq.s32.totalorder %s21, 1
    %p86 = por %p84, %p85
    %p88 = scmp.ne.s32.totalorder %s71, %s87
    %p89 = scmp.eq.s32.totalorder %s21, 0
    %p90 = por %p88, %p89
    %s92 = sadd.s32 %s91, 1
    %p95 = scmp.eq.s32.totalorder %s15, 1
    %p96 = scmp.ne.s32.totalorder %s91, %s93
    %p97 = scmp.eq.s32.totalorder %s15, 0
    %p98 = por %p96, %p97
    %p99 = scmp.ne.s32.totalorder %s91, %s93
    %p100 = scmp.eq.s32.totalorder %s20, 1
    %p101 = por %p99, %p100
    %p102 = scmp.ne.s32.totalorder %s93, %s94
    %p103 = scmp.eq.s32.totalorder %s20, 0
    %p104 = por %p102, %p103
    %p105 = scmp.ne.s32.totalorder %s93, %s94
    %p106 = scmp.eq.s32.totalorder %s21, 1
    %p107 = por %p105, %p106
    %p109 = scmp.ne.s32.totalorder %s94, %s108
    %p110 = scmp.eq.s32.totalorder %s21, 0
    %p111 = por %p109, %p110
    %s113 = sadd.s32 %s112, 1
    %p116 = scmp.eq.s32.totalorder %s15, 1
    %p117 = scmp.ne.s32.totalorder %s112, %s114
    %p118 = scmp.eq.s32.totalorder %s15, 0
    %p119 = por %p117, %p118
    %p120 = scmp.ne.s32.totalorder %s112, %s114
    %p121 = scmp.eq.s32.totalorder %s20, 1
    %p122 = por %p120, %p121
    %p123 = scmp.ne.s32.totalorder %s114, %s115
    %p124 = scmp.eq.s32.totalorder %s20, 0
    %p125 = por %p123, %p124
    %p126 = scmp.ne.s32.totalorder %s114, %s115
    %p127 = scmp.eq.s32.totalorder %s21, 1
    %p128 = por %p126, %p127
    %p130 = scmp.ne.s32.totalorder %s115, %s129
    %p131 = scmp.eq.s32.totalorder %s21, 0
    %p132 = por %p130, %p131
    %s134 = sadd.s32 %s133, 1
    %p137 = scmp.eq.s32.totalorder %s15, 1
    %p138 = scmp.ne.s32.totalorder %s133, %s135
    %p139 = scmp.eq.s32.totalorder %s15, 0
    %p140 = por %p138, %p139
    %p141 = scmp.ne.s32.totalorder %s133, %s135
    %p142 = scmp.eq.s32.totalorder %s20, 1
    %p143 = por %p141, %p142
    %p144 = scmp.ne.s32.totalorder %s135, %s136
    %p145 = scmp.eq.s32.totalorder %s20, 0
    %p146 = por %p144, %p145
    %p147 = scmp.ne.s32.totalorder %s135, %s136
    %p148 = scmp.eq.s32.totalorder %s21, 1
    %p149 = por %p147, %p148
    %p151 = scmp.ne.s32.totalorder %s136, %s150
    %p152 = scmp.eq.s32.totalorder %s21, 0
    %p153 = por %p151, %p152
    %s155 = sadd.s32 %s154, 1
    %p158 = scmp.eq.s32.totalorder %s15, 1
    %p159 = scmp.ne.s32.totalorder %s154, %s156
    %p160 = scmp.eq.s32.totalorder %s15, 0
    %p161 = por %p159, %p160
    %p162 = scmp.ne.s32.totalorder %s154, %s156
    %p163 = scmp.eq.s32.totalorder %s20, 1
    %p164 = por %p162, %p163
    %p165 = scmp.ne.s32.totalorder %s156, %s157
    %p166 = scmp.eq.s32.totalorder %s20, 0
    %p167 = por %p165, %p166
    %p168 = scmp.ne.s32.totalorder %s156, %s157
    %p169 = scmp.eq.s32.totalorder %s21, 1
    %p170 = por %p168, %p169
    %p172 = scmp.ne.s32.totalorder %s157, %s171
    %p173 = scmp.eq.s32.totalorder %s21, 0
    %p174 = por %p172, %p173
    %s175 = ssub.s32 %s22, %s34
    %s176 = ssub.s32 %s23, %s30
    %s177 = sor.u32 %s175, %s176
    %p178 = scmp.eq.s32.totalorder %s177, 0
    %s180 = sadd.s32 %s179, 1
    %s181 = scalar_select %p178, %s179, %s180
    %p184 = pneg %p178
    %p185 = scmp.eq.s32.totalorder %s15, 1
    %p186 = por %p184, %p185
    %p187 = scmp.ne.s32.totalorder %s179, %s182
    %p188 = scmp.eq.s32.totalorder %s15, 0
    %p189 = por %p187, %p188
    %p190 = scmp.ne.s32.totalorder %s179, %s182
    %p191 = scmp.eq.s32.totalorder %s20, 1
    %p192 = por %p190, %p191
    %p193 = scmp.ne.s32.totalorder %s182, %s183
    %p194 = scmp.eq.s32.totalorder %s20, 0
    %p195 = por %p193, %p194
    %p196 = scmp.ne.s32.totalorder %s182, %s183
    %p197 = scmp.eq.s32.totalorder %s21, 1
    %p198 = por %p196, %p197
    %p200 = scmp.ne.s32.totalorder %s183, %s199
    %p201 = scmp.eq.s32.totalorder %s21, 0
    %p202 = por %p200, %p201
    %s203 = ssub.s32 %s22, %s34
    %s204 = ssub.s32 %s23, %s30
    %s205 = sor.u32 %s203, %s204
    %p206 = scmp.eq.s32.totalorder %s205, 0
    %s208 = sadd.s32 %s207, 1
    %s209 = scalar_select %p206, %s207, %s208
    %p212 = pneg %p206
    %p213 = scmp.eq.s32.totalorder %s15, 1
    %p214 = por %p212, %p213
    %p215 = scmp.ne.s32.totalorder %s207, %s210
    %p216 = scmp.eq.s32.totalorder %s15, 0
    %p217 = por %p215, %p216
    %p218 = scmp.ne.s32.totalorder %s207, %s210
    %p219 = scmp.eq.s32.totalorder %s20, 1
    %p220 = por %p218, %p219
    %p221 = scmp.ne.s32.totalorder %s210, %s211
    %p222 = scmp.eq.s32.totalorder %s20, 0
    %p223 = por %p221, %p222
    %p224 = scmp.ne.s32.totalorder %s210, %s211
    %p225 = scmp.eq.s32.totalorder %s21, 1
    %p226 = por %p224, %p225
    %p228 = scmp.ne.s32.totalorder %s211, %s227
    %p229 = scmp.eq.s32.totalorder %s21, 0
    %p230 = por %p228, %p229
    %s231 = ssub.s32 %s22, %s34
    %s232 = ssub.s32 %s23, %s30
    %s233 = sor.u32 %s231, %s232
    %p234 = scmp.eq.s32.totalorder %s233, 0
    %s236 = sadd.s32 %s235, 1
    %s237 = scalar_select %p234, %s235, %s236
    %p240 = pneg %p234
    %p241 = scmp.eq.s32.totalorder %s15, 1
    %p242 = por %p240, %p241
    %p243 = scmp.ne.s32.totalorder %s235, %s238
    %p244 = scmp.eq.s32.totalorder %s15, 0
    %p245 = por %p243, %p244
    %p246 = scmp.ne.s32.totalorder %s235, %s238
    %p247 = scmp.eq.s32.totalorder %s20, 1
    %p248 = por %p246, %p247
    %p249 = scmp.ne.s32.totalorder %s238, %s239
    %p250 = scmp.eq.s32.totalorder %s20, 0
    %p251 = por %p249, %p250
    %p252 = scmp.ne.s32.totalorder %s238, %s239
    %p253 = scmp.eq.s32.totalorder %s21, 1
    %p254 = por %p252, %p253
    %p256 = scmp.ne.s32.totalorder %s239, %s255
    %p257 = scmp.eq.s32.totalorder %s21, 0
    %p258 = por %p256, %p257
    %p259 = scmp.le.s32.totalorder 1, %s15
    %p260 = scmp.lt.s32.totalorder %s15, 3
    %p261 = pnand %p259, %p260
    %p262 = pneg %p261
    // Predicated region
    $region9: #{attention_block.4} parent=5 // pred_check
      _
    $region10: #{attention_block.4} parent=5 // pred_check_branch
      %264 = sbr.rel (%p261) target = $region12
    $region11: #{attention_block.4} parent=5 // pred_region
      %s265 = ssub.s32 %s15, 1
      // Predicated region
      $region13: #{attention_block.4} parent=11 // pred_check
        %p266 = pneg %p104
      $region14: #{attention_block.4} parent=11 // pred_check_branch
        %268 = sbr.rel (%p266) target = $region16
      $region15: #{attention_block.4} parent=11 // pred_region
        _
      $region16: #{attention_block.4} parent=11 // pred_fallthru
        _
      // Predicated region
      $region17: #{attention_block.4} parent=11 // pred_check
        %p269 = pneg %p125
      $region18: #{attention_block.4} parent=11 // pred_check_branch
        %271 = sbr.rel (%p269) target = $region20
      $region19: #{attention_block.4} parent=11 // pred_region
        _
      $region20: #{attention_block.4} parent=11 // pred_fallthru
        _
      // Predicated region
      $region21: #{attention_block.4} parent=11 // pred_check
        %p272 = pneg %p146
      $region22: #{attention_block.4} parent=11 // pred_check_branch
        %274 = sbr.rel (%p272) target = $region24
      $region23: #{attention_block.4} parent=11 // pred_region
        _
      $region24: #{attention_block.4} parent=11 // pred_fallthru
        _
      // Predicated region
      $region25: #{attention_block.4} parent=11 // pred_check
        %p275 = pneg %p167
      $region26: #{attention_block.4} parent=11 // pred_check_branch
        %277 = sbr.rel (%p275) target = $region28
      $region27: #{attention_block.4} parent=11 // pred_region
        _
      $region28: #{attention_block.4} parent=11 // pred_fallthru
        _
    $region12: #{attention_block.4} parent=5 // pred_fallthru
      _
    %p278 = scmp.lt.s32.totalorder %s15, 2
    // Predicated region
    $region29: #{attention_block.4} parent=5 // pred_check
      %p279 = pneg %p278
    $region30: #{attention_block.4} parent=5 // pred_check_branch
      %281 = sbr.rel (%p279) target = $region32
    $region31: #{attention_block.4} parent=5 // pred_region
      // Predicated region
      $region33: #{attention_block.4} parent=31 // pred_check
        %p282 = pneg %p49
      $region34: #{attention_block.4} parent=31 // pred_check_branch
        %284 = sbr.rel (%p282) target = $region36
      $region35: #{attention_block.4} parent=31 // pred_region
        %s285 = smul.u32 2, %s23
        %p286 = scmp.lt.s32.totalorder %s22, 1
        %s287 = scalar_select %p286, %s22, 1
        %p288 = scmp.lt.s32.totalorder %s285, 1
        %s289 = scalar_select %p288, %s285, 1
        %s290 = smul.addr %s287, 2
        %s291 = sadd.s32 %s289, %s290
        %s292 = smul.addr %s291, 4
        %s293 = scalar_lea.vmem %s0, %s292
        %s294 = smul.u32 2, %s23
      $region36: #{attention_block.4} parent=31 // pred_fallthru
        _
      // Predicated region
      $region37: #{attention_block.4} parent=31 // pred_check
        %p295 = pneg %p77
      $region38: #{attention_block.4} parent=31 // pred_check_branch
        %297 = sbr.rel (%p295) target = $region40
      $region39: #{attention_block.4} parent=31 // pred_region
        %s298 = smul.u32 2, %s23
        %p299 = scmp.lt.s32.totalorder %s22, 1
        %s300 = scalar_select %p299, %s22, 1
        %p301 = scmp.lt.s32.totalorder %s298, 1
        %s302 = scalar_select %p301, %s298, 1
        %s303 = smul.addr %s300, 2
        %s304 = sadd.s32 %s302, %s303
        %s305 = smul.addr %s304, 4
        %s306 = scalar_lea.vmem %s1, %s305
        %s307 = smul.u32 2, %s23
      $region40: #{attention_block.4} parent=31 // pred_fallthru
        _
    $region32: #{attention_block.4} parent=5 // pred_fallthru
      _
    %p308 = scmp.le.s32.totalorder 1, %s15
    %p309 = scmp.lt.s32.totalorder %s15, 3
    %p310 = pnand %p308, %p309
    %p311 = pneg %p310
    // Predicated region
    $region41: #{attention_block.4} parent=5 // pred_check
      _
    $region42: #{attention_block.4} parent=5 // pred_check_branch
      %313 = sbr.rel (%p310) target = $region44
    $region43: #{attention_block.4} parent=5 // pred_region
      %s314 = ssub.s32 %s15, 1
      %s315 = smul.u32 2, %s25
      %p316 = scmp.lt.s32.totalorder %s24, 1
      %s317 = scalar_select %p316, %s24, 1
      %p318 = scmp.lt.s32.totalorder %s315, 1
      %s319 = scalar_select %p318, %s315, 1
      %s320 = smul.addr %s317, 2
      %s321 = sadd.s32 %s319, %s320
      %s322 = smul.addr %s321, 4
      %s323 = scalar_lea.vmem %s0, %s322
      %p324 = pneg %p55
      %p325 = pneg %p52
      %s326 = smul.u32 2, %s25
      %p327 = scmp.lt.s32.totalorder %s24, 1
      %s328 = scalar_select %p327, %s24, 1
      %p329 = scmp.lt.s32.totalorder %s326, 1
      %s330 = scalar_select %p329, %s326, 1
      %s331 = smul.addr %s328, 2
      %s332 = sadd.s32 %s330, %s331
      %s333 = smul.addr %s332, 4
      %s334 = scalar_lea.vmem %s1, %s333
      %p335 = pneg %p83
      %p336 = pneg %p80
      %p337 = pneg %p104
      %p338 = pneg %p101
      %p339 = pneg %p125
      %p340 = pneg %p122
      %p341 = pneg %p146
      %p342 = pneg %p143
      %p343 = pneg %p167
      %p344 = pneg %p164
      %p345 = pneg %p195
      %p346 = pneg %p192
      %s347 = smul.u32 2, %s25
      %p348 = scmp.lt.s32.totalorder %s24, 1
      %s349 = scalar_select %p348, %s24, 1
      %p350 = scmp.lt.s32.totalorder %s347, 1
      %s351 = scalar_select %p350, %s347, 1
      %s352 = smul.addr %s349, 2
      %s353 = sadd.s32 %s351, %s352
      %s354 = scalar_lea.vmem %s6, %s353
      %p355 = pneg %p223
      %p356 = pneg %p220
      %p357 = scmp.lt.s32.totalorder %s24, 1
      %s358 = scalar_select %p357, %s24, 1
      %p359 = scmp.lt.s32.totalorder %s25, 0
      %s360 = scalar_select %p359, %s25, 0
      %s361 = sadd.s32 %s360, %s358
      %s362 = scalar_lea.vmem %s7, %s361
      %p363 = pneg %p251
      %p364 = pneg %p248
      %p365 = scmp.lt.s32.totalorder %s24, 1
      %s366 = scalar_select %p365, %s24, 1
      %p367 = scmp.lt.s32.totalorder %s25, 0
      %s368 = scalar_select %p367, %s25, 0
      %s369 = sadd.s32 %s368, %s366
      %s370 = scalar_lea.vmem %s8, %s369
      %s371 = smul.u32 2, %s25
      %p372 = scmp.lt.s32.totalorder %s24, 1
      %s373 = scalar_select %p372, %s24, 1
      %p374 = scmp.lt.s32.totalorder %s371, 1
      %s375 = scalar_select %p374, %s371, 1
      %s376 = smul.addr %s373, 2
      %s377 = sadd.s32 %s375, %s376
      %s378 = smul.addr %s377, 4
      %s379 = scalar_lea.vmem %s0, %s378
      %s380 = smul.u32 2, %s25
      %s381 = smul.u32 2, %s25
      %p382 = scmp.lt.s32.totalorder %s24, 1
      %s383 = scalar_select %p382, %s24, 1
      %p384 = scmp.lt.s32.totalorder %s381, 1
      %s385 = scalar_select %p384, %s381, 1
      %s386 = smul.addr %s383, 2
      %s387 = sadd.s32 %s385, %s386
      %s388 = smul.addr %s387, 4
      %s389 = scalar_lea.vmem %s1, %s388
      %s390 = smul.u32 2, %s25
      %s391 = smul.u32 2, %s25
      %p392 = scmp.lt.s32.totalorder %s24, 1
      %s393 = scalar_select %p392, %s24, 1
      %p394 = scmp.lt.s32.totalorder %s391, 1
      %s395 = scalar_select %p394, %s391, 1
      %s396 = smul.addr %s393, 2
      %s397 = sadd.s32 %s395, %s396
      %s398 = scalar_lea.vmem %s6, %s397
      %s399 = smul.u32 2, %s25
      %p400 = scmp.lt.s32.totalorder %s24, 1
      %s401 = scalar_select %p400, %s24, 1
      %p402 = scmp.lt.s32.totalorder %s25, 0
      %s403 = scalar_select %p402, %s25, 0
      %s404 = sadd.s32 %s403, %s401
      %s405 = scalar_lea.vmem %s7, %s404
      %p406 = scmp.lt.s32.totalorder %s24, 1
      %s407 = scalar_select %p406, %s24, 1
      %p408 = scmp.lt.s32.totalorder %s25, 0
      %s409 = scalar_select %p408, %s25, 0
      %s410 = sadd.s32 %s409, %s407
      %s411 = scalar_lea.vmem %s8, %s410
      %v412 = vld [vmem:[%s2] sm:$0xff]
      %v413 = vld [vmem:[%s379] sm:$0xff]
      %v414 = vld [vmem:[%s3] sm:$0xff]
      %v415 = vld [vmem:[%s389] sm:$0xff]
      %v417 = vcombine.high %v415, %v415
      %vm418 = vcmask 31744
      %v420 = vsel %vm418, %v414, 0
      %vm422 = vcmask 1043456
      %v423 = vsel %vm422, %v415, 0
      %v425 = vsel %vm422, %v417, 0
      %427 = vmatprep.subr.mxu0 0.0
      %428 = vmatpush1.msra.mxu0 0.0
      %429 = vmatprep.subr.mxu0 0.0
      %430 = vmatpush1.msra.mxu0 0.0
      %431 = vmatprep.subr.mxu0 0.0
      %432 = vmatpush1.msra.mxu0 0.0
      %433 = vmatprep.subr.mxu0 0.0
      %434 = vmatpush1.msra.mxu0 0.0
      %435 = vmatprep.subr.mxu0 0.0
      %436 = vmatpush1.msra.mxu0 0.0
      %437 = vmatprep.subr.mxu0 0.0
      %438 = vmatpush1.msra.mxu0 0.0
      %439 = vmatprep.subr.mxu0 0.0
      %440 = vmatpush1.msra.mxu0 0.0
      %441 = vmatprep.subr.mxu0 0.0
      %442 = vmatpush1.msra.mxu0 0.0
      %443 = vmatprep.subr.mxu0 0.0
      %444 = vmatpush1.msra.mxu0 0.0
      %445 = vmatprep.subr.mxu0 0.0
      %446 = vmatpush1.msra.mxu0 0.0
      %447 = vmatprep.subr.mxu0 0.0
      %448 = vmatpush1.msra.mxu0 0.0
      %449 = vmatprep.subr.mxu0 0.0
      %450 = vmatpush1.msra.mxu0 0.0
      %451 = vmatprep.subr.mxu0 0.0
      %452 = vmatpush1.msra.mxu0 0.0
      %453 = vmatprep.subr.mxu0 0.0
      %454 = vmatpush1.msra.mxu0 0.0
      %455 = vmatprep.subr.mxu0 0.0
      %456 = vmatpush1.msra.mxu0 0.0
      %457 = vmatprep.subr.mxu0 %v425
      %458 = vmatpush1.msra.mxu0 %v423
      %459 = vmatprep.subr.mxu0 0.0
      %460 = vmatpush2.msra.mxu0 0.0
      %461 = vmatprep.subr.mxu0 0.0
      %462 = vmatpush2.msra.mxu0 0.0
      %463 = vmatprep.subr.mxu0 0.0
      %464 = vmatpush2.msra.mxu0 0.0
      %465 = vmatprep.subr.mxu0 0.0
      %466 = vmatpush2.msra.mxu0 0.0
      %467 = vmatprep.subr.mxu0 0.0
      %468 = vmatpush2.msra.mxu0 0.0
      %469 = vmatprep.subr.mxu0 0.0
      %470 = vmatpush2.msra.mxu0 0.0
      %471 = vmatprep.subr.mxu0 0.0
      %472 = vmatpush2.msra.mxu0 0.0
      %473 = vmatprep.subr.mxu0 0.0
      %474 = vmatpush2.msra.mxu0 0.0
      %475 = vmatprep.subr.mxu0 0.0
      %476 = vmatpush2.msra.mxu0 0.0
      %477 = vmatprep.subr.mxu0 0.0
      %478 = vmatpush2.msra.mxu0 0.0
      %479 = vmatprep.subr.mxu0 0.0
      %480 = vmatpush2.msra.mxu0 0.0
      %481 = vmatprep.subr.mxu0 0.0
      %482 = vmatpush2.msra.mxu0 0.0
      %483 = vmatprep.subr.mxu0 0.0
      %484 = vmatpush2.msra.mxu0 0.0
      %485 = vmatprep.subr.mxu0 0.0
      %486 = vmatpush2.msra.mxu0 0.0
      %487 = vmatprep.subr.mxu0 0.0
      %488 = vmatpush2.msra.mxu0 0.0
      %489 = vmatprep.subr.mxu0 0.0
      %490 = vmatpush2.msra.mxu0 0.0
      %491 = vmatprep.mubr.f32.mxu0 0.0
      %492 = vmatmul.mubr.f32.gmra.mxu0 %v420
      %v493 = vpop.f32.mrf.mxu0
      %v494 = vadd.f32 0.0, %v493
      %v495 = vpop.f32.mrf.mxu0
      %v496 = vadd.f32 0.0, %v495
      %497 = vdwg.mxu0
      %v499 = vcombine.high %v413, %v413
      %v501 = vsel %vm418, %v412, 0
      %v503 = vsel %vm422, %v413, 0
      %v505 = vsel %vm422, %v499, 0
      %507 = vmatprep.subr.mxu0 0.0
      %508 = vmatpush1.msra.mxu0 0.0
      %509 = vmatprep.subr.mxu0 0.0
      %510 = vmatpush1.msra.mxu0 0.0
      %511 = vmatprep.subr.mxu0 0.0
      %512 = vmatpush1.msra.mxu0 0.0
      %513 = vmatprep.subr.mxu0 0.0
      %514 = vmatpush1.msra.mxu0 0.0
      %515 = vmatprep.subr.mxu0 0.0
      %516 = vmatpush1.msra.mxu0 0.0
      %517 = vmatprep.subr.mxu0 0.0
      %518 = vmatpush1.msra.mxu0 0.0
      %519 = vmatprep.subr.mxu0 0.0
      %520 = vmatpush1.msra.mxu0 0.0
      %521 = vmatprep.subr.mxu0 0.0
      %522 = vmatpush1.msra.mxu0 0.0
      %523 = vmatprep.subr.mxu0 0.0
      %524 = vmatpush1.msra.mxu0 0.0
      %525 = vmatprep.subr.mxu0 0.0
      %526 = vmatpush1.msra.mxu0 0.0
      %527 = vmatprep.subr.mxu0 0.0
      %528 = vmatpush1.msra.mxu0 0.0
      %529 = vmatprep.subr.mxu0 0.0
      %530 = vmatpush1.msra.mxu0 0.0
      %531 = vmatprep.subr.mxu0 0.0
      %532 = vmatpush1.msra.mxu0 0.0
      %533 = vmatprep.subr.mxu0 0.0
      %534 = vmatpush1.msra.mxu0 0.0
      %535 = vmatprep.subr.mxu0 0.0
      %536 = vmatpush1.msra.mxu0 0.0
      %537 = vmatprep.subr.mxu0 %v505
      %538 = vmatpush1.msra.mxu0 %v503
      %539 = vmatprep.subr.mxu0 0.0
      %540 = vmatpush2.msra.mxu0 0.0
      %541 = vmatprep.subr.mxu0 0.0
      %542 = vmatpush2.msra.mxu0 0.0
      %543 = vmatprep.subr.mxu0 0.0
      %544 = vmatpush2.msra.mxu0 0.0
      %545 = vmatprep.subr.mxu0 0.0
      %546 = vmatpush2.msra.mxu0 0.0
      %547 = vmatprep.subr.mxu0 0.0
      %548 = vmatpush2.msra.mxu0 0.0
      %549 = vmatprep.subr.mxu0 0.0
      %550 = vmatpush2.msra.mxu0 0.0
      %551 = vmatprep.subr.mxu0 0.0
      %552 = vmatpush2.msra.mxu0 0.0
      %553 = vmatprep.subr.mxu0 0.0
      %554 = vmatpush2.msra.mxu0 0.0
      %555 = vmatprep.subr.mxu0 0.0
      %556 = vmatpush2.msra.mxu0 0.0
      %557 = vmatprep.subr.mxu0 0.0
      %558 = vmatpush2.msra.mxu0 0.0
      %559 = vmatprep.subr.mxu0 0.0
      %560 = vmatpush2.msra.mxu0 0.0
      %561 = vmatprep.subr.mxu0 0.0
      %562 = vmatpush2.msra.mxu0 0.0
      %563 = vmatprep.subr.mxu0 0.0
      %564 = vmatpush2.msra.mxu0 0.0
      %565 = vmatprep.subr.mxu0 0.0
      %566 = vmatpush2.msra.mxu0 0.0
      %567 = vmatprep.subr.mxu0 0.0
      %568 = vmatpush2.msra.mxu0 0.0
      %569 = vmatprep.subr.mxu0 0.0
      %570 = vmatpush2.msra.mxu0 0.0
      %571 = vmatprep.mubr.f32.mxu0 0.0
      %572 = vmatmul.mubr.f32.gmra.mxu0 %v501
      %v573 = vpop.f32.mrf.mxu0
      %v574 = vadd.f32 %v494, %v573
      %v575 = vpop.f32.mrf.mxu0
      %v576 = vadd.f32 %v496, %v575
      %577 = vdwg.mxu0
      %v578 = vld [vmem:[%s4] sm:$0xff]
      %580 = vset.pattern.permute.xlu0 0
      %581 = vperm.xlu0 %580, %v578
      %v582 = vpop.permute.xlu0 %581
      %v584 = vadd.f32 %v574, %v582
      %v585 = vadd.f32 %v576, %v582
      %v586 = vmax.f32 %v584, 0.0
      %v587 = vmax.f32 %v585, 0.0
      %v588 = vld [vmem:[%s5] sm:$0xff]
      %590 = vset.pattern.permute.xlu0 0
      %591 = vperm.xlu0 %590, %v588
      %v592 = vpop.permute.xlu0 %591
      %v594 = vmul.f32 %v592, %v586
      %v595 = vmul.f32 %v592, %v587
      %v596 = vrot.slane %v594, 4
      %v597 = vadd.f32 %v594, %v596
      %v598 = vrot.slane %v597, 2
      %v599 = vadd.f32 %v597, %v598
      %v600 = vrot.slane %v599, 1
      %v601 = vadd.f32 %v599, %v600
      %v602 = vrot.slane %v595, 4
      %v603 = vadd.f32 %v595, %v602
      %v604 = vrot.slane %v603, 2
      %v605 = vadd.f32 %v603, %v604
      %v606 = vrot.slane %v605, 1
      %v607 = vadd.f32 %v605, %v606
      %v610 = vcombine.low %v601, %v607
      %v612 = vunpack.c.l.s4 1966171168
      %v613 = vunpack.c.0.s8 %v612
      %v614 = vlaneseq
      %v615 = vshrl.u32 %v614, 7
      %v616 = vsub.s32 %v613, %v615
      %v617 = vrot.slane %v610, %v616
      %v619 = vunpack.c.l.s4 1966171168
      %v620 = vunpack.c.0.s8 %v619
      %v621 = vlaneseq
      %v622 = vshrl.u32 %v621, 7
      %v623 = vsub.s32 %v620, %v622
      %v624 = vrot.slane %v617, %v623
      %v626 = vlaneseq
      %vm627 = vcmp.ge.s32.totalorder %v626, 0
      %vm628 = vcmp.lt.s32.totalorder %v626, 256
      %vm629 = vmand %vm627, %vm628
      %630 = vst.msk [vmem:[%s398] sm:$0x3] %vm629, %v624
      %v631 = vadd.f32 %v601, %v607
      %632 = vadd.xlane.f32.xlu0 %v631
      %v633 = vpop.xlane.xlu0 %632
      %vm634 = vcmask 0
      %635 = vst.msk [vmem:[%s405] sm:$0x1] %vm634, %v633
      %v636 = vmul.f32 %v601, %v601
      %v637 = vmul.f32 %v607, %v607
      %v638 = vadd.f32 %v636, %v637
      %639 = vadd.xlane.f32.xlu0 %v638
      %v640 = vpop.xlane.xlu0 %639
      %641 = vst.msk [vmem:[%s411] sm:$0x1] %vm634, %v640
      %s642 = smul.u32 2, %s25
      %p643 = scmp.lt.s32.totalorder %s24, 1
      %s644 = scalar_select %p643, %s24, 1
      %p645 = scmp.lt.s32.totalorder %s642, 1
      %s646 = scalar_select %p645, %s642, 1
      %s647 = smul.addr %s644, 2
      %s648 = sadd.s32 %s646, %s647
      %s649 = scalar_lea.vmem %s6, %s648
      %p650 = scmp.lt.s32.totalorder %s24, 1
      %s651 = scalar_select %p650, %s24, 1
      %p652 = scmp.lt.s32.totalorder %s25, 0
      %s653 = scalar_select %p652, %s25, 0
      %s654 = sadd.s32 %s653, %s651
      %s655 = scalar_lea.vmem %s7, %s654
      %p656 = scmp.lt.s32.totalorder %s24, 1
      %s657 = scalar_select %p656, %s24, 1
      %p658 = scmp.lt.s32.totalorder %s25, 0
      %s659 = scalar_select %p658, %s25, 0
      %s660 = sadd.s32 %s659, %s657
      %s661 = scalar_lea.vmem %s8, %s660
      // Predicated region
      $region45: #{attention_block.4} parent=43 // pred_check
        %p662 = pneg %p192
      $region46: #{attention_block.4} parent=43 // pred_check_branch
        %664 = sbr.rel (%p662) target = $region48
      $region47: #{attention_block.4} parent=43 // pred_region
        %s665 = smul.u32 2, %s25
      $region48: #{attention_block.4} parent=43 // pred_fallthru
        _
      // Predicated region
      $region49: #{attention_block.4} parent=43 // pred_check
        %p666 = pneg %p220
      $region50: #{attention_block.4} parent=43 // pred_check_branch
        %668 = sbr.rel (%p666) target = $region52
      $region51: #{attention_block.4} parent=43 // pred_region
        _
      $region52: #{attention_block.4} parent=43 // pred_fallthru
        _
      // Predicated region
      $region53: #{attention_block.4} parent=43 // pred_check
        %p669 = pneg %p248
      $region54: #{attention_block.4} parent=43 // pred_check_branch
        %671 = sbr.rel (%p669) target = $region56
      $region55: #{attention_block.4} parent=43 // pred_region
        _
      $region56: #{attention_block.4} parent=43 // pred_fallthru
        _
    $region44: #{attention_block.4} parent=5 // pred_fallthru
      _
    %p672 = scmp.le.s32.totalorder 2, %s15
    // Predicated region
    $region57: #{attention_block.4} parent=5 // pred_check
      %p673 = pneg %p672
    $region58: #{attention_block.4} parent=5 // pred_check_branch
      %675 = sbr.rel (%p673) target = $region60
    $region59: #{attention_block.4} parent=5 // pred_region
      %s676 = ssub.s32 %s15, 2
      // Predicated region
      $region61: #{attention_block.4} parent=59 // pred_check
        %p677 = pneg %p198
      $region62: #{attention_block.4} parent=59 // pred_check_branch
        %679 = sbr.rel (%p677) target = $region64
      $region63: #{attention_block.4} parent=59 // pred_region
        %s680 = smul.u32 2, %s27
        %p681 = scmp.lt.s32.totalorder %s26, 1
        %s682 = scalar_select %p681, %s26, 1
        %p683 = scmp.lt.s32.totalorder %s680, 1
        %s684 = scalar_select %p683, %s680, 1
        %s685 = smul.addr %s682, 2
        %s686 = sadd.s32 %s684, %s685
        %s687 = scalar_lea.vmem %s6, %s686
      $region64: #{attention_block.4} parent=59 // pred_fallthru
        _
      // Predicated region
      $region65: #{attention_block.4} parent=59 // pred_check
        %p688 = pneg %p226
      $region66: #{attention_block.4} parent=59 // pred_check_branch
        %690 = sbr.rel (%p688) target = $region68
      $region67: #{attention_block.4} parent=59 // pred_region
        %p691 = scmp.lt.s32.totalorder %s26, 1
        %s692 = scalar_select %p691, %s26, 1
        %p693 = scmp.lt.s32.totalorder %s27, 0
        %s694 = scalar_select %p693, %s27, 0
        %s695 = sadd.s32 %s694, %s692
        %s696 = scalar_lea.vmem %s7, %s695
      $region68: #{attention_block.4} parent=59 // pred_fallthru
        _
      // Predicated region
      $region69: #{attention_block.4} parent=59 // pred_check
        %p697 = pneg %p254
      $region70: #{attention_block.4} parent=59 // pred_check_branch
        %699 = sbr.rel (%p697) target = $region72
      $region71: #{attention_block.4} parent=59 // pred_region
        %p700 = scmp.lt.s32.totalorder %s26, 1
        %s701 = scalar_select %p700, %s26, 1
        %p702 = scmp.lt.s32.totalorder %s27, 0
        %s703 = scalar_select %p702, %s27, 0
        %s704 = sadd.s32 %s703, %s701
        %s705 = scalar_lea.vmem %s8, %s704
      $region72: #{attention_block.4} parent=59 // pred_fallthru
        _
    $region60: #{attention_block.4} parent=5 // pred_fallthru
      _
  $region6: #{attention_block.4} parent=0 // loop_footer
    %s19 = sadd.s32 1, %s15
  $region7: #{attention_block.4} parent=0 // loop_footer_branch
    %14 = sbr.rel target = $region3
  $region8: #{attention_block.4} parent=0 // loop_exit
    _

</llo_original>
